<compile_context>
chip_gen: v5e
topology: v5e:2x2
jax: 0.10.0
libtpu: 0.0.40
codegen_flags: <defaults>
</compile_context>

<pallas_src>
import functools
import math

import numpy as np
import jax
import jax.numpy as jnp
from jax.experimental import pallas as pl
from jax.experimental.pallas import tpu as pltpu

_INV_SQRT2 = 1.0 / math.sqrt(2.0)
_LANE = 128     # lane (last-dim) tile width
_SUBLANE = 8    # sublane (second-to-last dim) tile width


def _round_up(x, m):
    return (x + m - 1) // m * m


def _cdiv(a, b):
    return -(-a // b)


def _vmem_capacity_bytes():
    """Physical VMEM per TensorCore (generation-aware); conservative fallback (v7x)."""
    try:
        info = pltpu.get_tpu_info()
        cap = int(getattr(info, "vmem_capacity_bytes", 0) or 0)
        if cap > 0:
            return cap
    except Exception:
        pass
    return 64 << 20


def _fused_mlp_kernel(*refs, n_layers, compute_dtype, precision, approx_gelu):
    """refs = (x_ref, w0, b0, w1, b1, ..., w_{L-1}, b_{L-1}, o_ref).

    Computes the full MLP for one (tm, D0) tile of tokens. The activation stays resident
    on-chip across layers, so there is exactly one HBM read of x and one HBM write of the
    output per token tile.
    """
    x_ref = refs[0]
    o_ref = refs[1 + 2 * n_layers]
    # Cast straight to the MXU operand dtype — no f32 round trip on layer 0.
    h = x_ref[...].astype(compute_dtype)
    for li in range(n_layers):
        w = refs[1 + 2 * li][...]                       # already stored in compute_dtype
        b = refs[2 + 2 * li][...].astype(jnp.float32)
        y = jnp.dot(h, w, preferred_element_type=jnp.float32, precision=precision)
        y = y + b
        if li < n_layers - 1:
            if approx_gelu:
                # tanh-form GELU dispatches to the EUP (separate bundle slot) — frees the
                # VALU, which is the saturated slot for modest widths on v6e/v7x.
                y = jax.nn.gelu(y, approximate=True)
            else:
                # Exact erf GELU (matches torch / transformers GELUActivation).
                y = 0.5 * y * (1.0 + jax.lax.erf(y * _INV_SQRT2))
            # Carry the inter-layer activation in compute_dtype: halves VMEM spill/reload
            # traffic and the cast was going to happen before the next matmul anyway.
            h = y.astype(compute_dtype)
        else:
            h = y
    o_ref[...] = h.astype(o_ref.dtype)


# Tri-state cache for the Buffered(1) single-buffer-params probe.
_SINGLE_BUFFER_PARAMS_OK = None


def fused_mlp_pallas(x, weights, biases, *, compute_dtype, out_dtype,
                     approx_gelu, precision, tm_max=None):
    """x: (M, D0) — fed as-is (no padding). weights[i]: (Kin_i, Kout_i); feature padding
    to multiples of 128 is baked into the stored weights for all *interior* dims only.
    biases[i]: (1, Kout_i), f32.
    """
    global _SINGLE_BUFFER_PARAMS_OK
    m, d0 = x.shape
    n_layers = len(weights)
    d_last = weights[-1].shape[1]

    vmem_phys = _vmem_capacity_bytes()
    vmem_cap = min(vmem_phys - (16 << 20), 112 << 20)   # generation-aware budget

    # ---- token-axis tiling (no row padding; balanced tiles) --------------------------
    if tm_max is None:
        tm_max = 512 if vmem_phys >= (96 << 20) else 256   # bigger tiles on v5e/v6e
    if m <= tm_max:
        tm = m                      # single tile == full dim (spec-legal, no masking)
        n_tiles = 1
    else:
        n_tiles = _cdiv(m, tm_max)
        if n_tiles % 2 == 1:
            n_tiles += 1            # keep both v7x TensorCores busy / balance tiles
        tm = _round_up(_cdiv(m, n_tiles), _SUBLANE)
        n_tiles = _cdiv(m, tm)      # last tile may be partial -> Pallas masks it

    param_bytes = sum(w.size * w.dtype.itemsize + b.size * b.dtype.itemsize
                      for w, b in zip(weights, biases))
    x_bytes = m * d0 * x.dtype.itemsize
    out_bytes = m * d_last * np.dtype(out_dtype).itemsize
    # Megacore: only shard token tiles across TCs when the activation traffic (which
    # parallelism splits) outweighs the weight traffic (which parallelism duplicates).
    parallel = n_tiles >= 2 and (n_tiles >= 4 or (x_bytes + out_bytes) >= param_bytes)

    max_width = max(w.shape[1] for w in weights)
    cd_itemsize = np.dtype(compute_dtype).itemsize

    flops = 2 * m * sum(w.shape[0] * w.shape[1] for w in weights)
    transcendentals = m * sum(w.shape[1] for w in weights[:-1])
    cost = pl.CostEstimate(flops=flops, transcendentals=transcendentals,
                           bytes_accessed=x_bytes + out_bytes + param_bytes)

    args = [x]
    for w, b in zip(weights, biases):
        args += [w, b]

    def build(single_buffer_params):
        const_kwargs = {}
        if single_buffer_params:
            # Constant index_map -> no "next block" ever needs prefetching, so a single
            # VMEM buffer suffices for every weight/bias (halves their VMEM footprint).
            const_kwargs = dict(pipeline_mode=pl.Buffered(1))
        in_specs = [pl.BlockSpec((tm, d0), lambda i: (i, 0))]
        for w, b in zip(weights, biases):
            kin, kout = w.shape
            in_specs.append(pl.BlockSpec((kin, kout), lambda i: (0, 0), **const_kwargs))
            in_specs.append(pl.BlockSpec((1, kout), lambda i: (0, 0), **const_kwargs))
        out_specs = pl.BlockSpec((tm, d_last), lambda i: (i, 0))

        param_factor = 1 if single_buffer_params else 2
        # Activation scratch estimate: f32 dot output + compute_dtype operand copies.
        act_bytes = tm * max_width * (4 + 2 * cd_itemsize) \
            + tm * max(d0, max_width) * cd_itemsize
        vmem_need = (2 * tm * d0 * x.dtype.itemsize
                     + 2 * tm * d_last * np.dtype(out_dtype).itemsize
                     + param_factor * param_bytes
                     + act_bytes)
        # TODO(synk): when the weights alone exceed the budget, stream K/N weight tiles via
        #             an in-kernel pltpu.emit_pipeline (keeps the activation on-chip even
        #             when whole-weight residency is impossible) instead of failing.
        assert vmem_need <= vmem_cap, (
            f"fused MLP does not fit VMEM: need {vmem_need} > cap {vmem_cap}")
        vmem_limit = int(min(vmem_cap,
                             max(16 << 20,
                                 _round_up(vmem_need + vmem_need // 4 + (2 << 20),
                                           1 << 20))))

        kern = functools.partial(_fused_mlp_kernel, n_layers=n_layers,
                                 compute_dtype=compute_dtype, precision=precision,
                                 approx_gelu=approx_gelu)
        return pl.pallas_call(
            kern,
            out_shape=jax.ShapeDtypeStruct((m, d_last), out_dtype),
            grid=(n_tiles,),
            in_specs=in_specs,
            out_specs=out_specs,
            compiler_params=pltpu.CompilerParams(
                dimension_semantics=("parallel" if parallel else "arbitrary",),
                vmem_limit_bytes=vmem_limit,
            ),
            cost_estimate=cost,
        )

    if _SINGLE_BUFFER_PARAMS_OK is None:
        try:
            out = jax.block_until_ready(build(True)(*args))
            _SINGLE_BUFFER_PARAMS_OK = True
            return out
        except Exception:
            # Installed jax rejects Buffered(1) on pallas_call specs -> default buffering.
            _SINGLE_BUFFER_PARAMS_OK = False
    return build(_SINGLE_BUFFER_PARAMS_OK)(*args)


class MLPHead:
    """JAX/Pallas port of the PyTorch MLPHead.

    dims = (d0, d1, ..., dn): Linear(d0->d1)+GELU, ..., Linear(d_{n-1}->d_n) (no GELU last).
    dims = (d0, None): Identity.

    compute_dtype: MXU operand dtype. bf16 (default) feeds the v6e/v7x MXU at full rate
    and halves weight DMA; padded weights are stored already cast to it (inference-time
    quantization, documented). f32 uses Precision.HIGHEST + exact erf GELU for tight
    reference parity. approx_gelu defaults to tanh-GELU on the bf16 path only.
    """

    def __init__(self, dims, dropout=0.0, key=None, compute_dtype=jnp.bfloat16,
                 approx_gelu=None, tm_max=None):
        self.identity = len(dims) == 2 and dims[1] is None
        if self.identity:
            return
        # TODO(synk): dropout > 0 (training-mode random masking) not implemented;
        #             at inference dropout is identity, so eval semantics match.
        self.compute_dtype = compute_dtype
        is_f32 = np.dtype(compute_dtype) == np.dtype(np.float32)
        self.approx_gelu = (not is_f32) if approx_gelu is None else bool(approx_gelu)
        self.precision = jax.lax.Precision.HIGHEST if is_f32 else None
        self.tm_max = tm_max
        if key is None:
            key = jax.random.PRNGKey(0)
        self.in_dim = dims[0]
        self.out_dim = dims[-1]
        self.params = []   # unpadded f32 (w, b) — reference / export layout
        self._w = []       # padded weights, stored in compute_dtype
        self._b = []       # padded biases, f32
        n_layers = len(dims) - 1
        for li, (dim_from, dim_to) in enumerate(zip(dims[:-1], dims[1:])):
            key, wk, bk = jax.random.split(key, 3)
            bound = 1.0 / math.sqrt(dim_from)   # torch.nn.Linear default init bounds
            w = jax.random.uniform(wk, (dim_from, dim_to), jnp.float32, -bound, bound)
            b = jax.random.uniform(bk, (1, dim_to), jnp.float32, -bound, bound)
            self.params.append((w, b))
            # Pad only *interior* feature dims to 128: layer 0 keeps its input dim, the
            # last layer keeps its output dim -> x and the result need no wrapper copies.
            kin = dim_from if li == 0 else _round_up(dim_from, _LANE)
            kout = dim_to if li == n_layers - 1 else _round_up(dim_to, _LANE)
            w_p = jnp.zeros((kin, kout), jnp.float32).at[:dim_from, :dim_to].set(w)
            b_p = jnp.zeros((1, kout), jnp.float32).at[:, :dim_to].set(b)
            self._w.append(w_p.astype(compute_dtype))
            self._b.append(b_p)

    def __call__(self, x):
        if self.identity:
            return x
        lead = x.shape[:-1]
        h = x.reshape(-1, self.in_dim)   # metadata-only; no pad/slice HBM traffic
        out = fused_mlp_pallas(h, self._w, self._b,
                               compute_dtype=self.compute_dtype,
                               out_dtype=x.dtype,
                               approx_gelu=self.approx_gelu,
                               precision=self.precision,
                               tm_max=self.tm_max)
        return out.reshape(*lead, self.out_dim)


if __name__ == "__main__":
    key = jax.random.PRNGKey(0)
    k_x, k_p, k_x2, k_x3 = jax.random.split(key, 4)

    dims = (32, 64, 16)
    x = jax.random.normal(k_x, (2, 8, dims[0]), dtype=jnp.float32)

    def reference(xx, params):
        h = xx.reshape(-1, xx.shape[-1])
        for li, (w, b) in enumerate(params):
            h = jnp.dot(h, w, precision=jax.lax.Precision.HIGHEST) + b
            if li < len(params) - 1:
                h = 0.5 * h * (1.0 + jax.lax.erf(h * _INV_SQRT2))
        return h.reshape(*xx.shape[:-1], h.shape[-1])

    # 1) f32 parity path (exact erf GELU, Precision.HIGHEST): tight numerical agreement.
    head_f32 = MLPHead(dims, dropout=0.0, key=k_p, compute_dtype=jnp.float32)
    out = jax.block_until_ready(head_f32(x))
    assert out.shape == (2, 8, dims[-1]), out.shape
    ref = reference(x, head_f32.params)
    assert jnp.allclose(out, ref, atol=1e-5, rtol=1e-5)

    # 2) bf16 fast path (bf16 MXU operands, f32 accumulate, tanh GELU): looser tolerance.
    head_bf16 = MLPHead(dims, dropout=0.0, key=k_p)   # same key -> same underlying params
    out_bf16 = jax.block_until_ready(head_bf16(x))
    assert out_bf16.shape == (2, 8, dims[-1])
    assert jnp.allclose(out_bf16, ref, atol=5e-2, rtol=5e-2)

    # 3) Multi-tile grid with a ragged (masked) last tile: M=210, tm_max=128 -> 2 tiles
    #    of 112 rows (last tile only 98 valid rows), no M padding anywhere.
    head_tiled = MLPHead(dims, dropout=0.0, key=k_p, compute_dtype=jnp.float32, tm_max=128)
    x_rag = jax.random.normal(k_x2, (3, 70, dims[0]), dtype=jnp.float32)
    out_rag = jax.block_until_ready(head_tiled(x_rag))
    ref_rag = reference(x_rag, head_tiled.params)
    assert out_rag.shape == (3, 70, dims[-1])
    assert jnp.allclose(out_rag, ref_rag, atol=1e-5, rtol=1e-5)

    # 4) Even-balanced multi-tile: M=320, tm_max=128 -> 4 tiles of 80 rows (megacore-even).
    x_even = jax.random.normal(k_x3, (4, 80, dims[0]), dtype=jnp.float32)
    out_even = jax.block_until_ready(head_tiled(x_even))
    ref_even = reference(x_even, head_tiled.params)
    assert out_even.shape == (4, 80, dims[-1])
    assert jnp.allclose(out_even, ref_even, atol=1e-5, rtol=1e-5)

    # 5) Identity branch (dims[1] is None).
    ident = MLPHead((dims[0], None))
    out_id = jax.block_until_ready(ident(x))
    assert jnp.array_equal(out_id, x)

    print("KERNEL_OK")
</pallas_src>

<mosaic_0001>
module attributes {stable_mosaic.version = 11 : i64} {
  func.func @_fused_mlp_kernel(%arg0: i32, %arg1: memref<16x32xf32, #tpu.memory_space<vmem>>, %arg2: memref<32x128xf32, #tpu.memory_space<vmem>>, %arg3: memref<1x128xf32, #tpu.memory_space<vmem>>, %arg4: memref<128x16xf32, #tpu.memory_space<vmem>>, %arg5: memref<1x16xf32, #tpu.memory_space<vmem>>, %arg6: memref<16x16xf32, #tpu.memory_space<vmem>>) attributes {dimension_semantics = [#tpu.dimension_semantics<arbitrary>], iteration_bounds = array<i64: 1>, scalar_prefetch = 0 : i64, scratch_operands = 0 : i64, tpu.core_type = #tpu.core_type<tc>, window_params = [{transform_indices = @transform_0, window_bounds = array<i64: 16, 32>}, {pipeline_mode = #tpu.pipeline_mode<synchronous>, transform_indices = @transform_1, window_bounds = array<i64: 32, 128>}, {pipeline_mode = #tpu.pipeline_mode<synchronous>, transform_indices = @transform_2, window_bounds = array<i64: 1, 128>}, {pipeline_mode = #tpu.pipeline_mode<synchronous>, transform_indices = @transform_3, window_bounds = array<i64: 128, 16>}, {pipeline_mode = #tpu.pipeline_mode<synchronous>, transform_indices = @transform_4, window_bounds = array<i64: 1, 16>}, {transform_indices = @transform_5, window_bounds = array<i64: 16, 16>}]} {
    %c0 = arith.constant 0 : index
    %c0_0 = arith.constant 0 : index
    %0 = vector.load %arg1[%c0, %c0_0] : memref<16x32xf32, #tpu.memory_space<vmem>>, vector<16x32xf32>
    %c0_1 = arith.constant 0 : index
    %c0_2 = arith.constant 0 : index
    %1 = vector.load %arg2[%c0_1, %c0_2] : memref<32x128xf32, #tpu.memory_space<vmem>>, vector<32x128xf32>
    %c0_3 = arith.constant 0 : index
    %c0_4 = arith.constant 0 : index
    %2 = vector.load %arg3[%c0_3, %c0_4] : memref<1x128xf32, #tpu.memory_space<vmem>>, vector<1x128xf32>
    %cst = arith.constant dense<0.000000e+00> : vector<16x128xf32>
    %3 = tpu.matmul %0, %1, %cst {dimension_numbers = #tpu.dot_dimension_numbers<[1], [0], [0], [1], [0, 0, 1, 1], [], []>, precision = #tpu.contract_precision<fp32>} : vector<16x32xf32>, vector<32x128xf32>, vector<16x128xf32> -> vector<16x128xf32>
    %4 = vector.broadcast %2 : vector<1x128xf32> to vector<16x128xf32>
    %5 = arith.addf %3, %4 : vector<16x128xf32>
    %cst_5 = arith.constant 5.000000e-01 : f32
    %6 = vector.broadcast %cst_5 : f32 to vector<16x128xf32>
    %7 = arith.mulf %6, %5 : vector<16x128xf32>
    %cst_6 = arith.constant 0.707106769 : f32
    %8 = vector.broadcast %cst_6 : f32 to vector<16x128xf32>
    %9 = arith.mulf %5, %8 : vector<16x128xf32>
    %10 = math.erf %9 : vector<16x128xf32>
    %cst_7 = arith.constant 1.000000e+00 : f32
    %11 = vector.broadcast %cst_7 : f32 to vector<16x128xf32>
    %12 = arith.addf %11, %10 : vector<16x128xf32>
    %13 = arith.mulf %7, %12 : vector<16x128xf32>
    %c0_8 = arith.constant 0 : index
    %c0_9 = arith.constant 0 : index
    %14 = vector.load %arg4[%c0_8, %c0_9] : memref<128x16xf32, #tpu.memory_space<vmem>>, vector<128x16xf32>
    %c0_10 = arith.constant 0 : index
    %c0_11 = arith.constant 0 : index
    %15 = vector.load %arg5[%c0_10, %c0_11] : memref<1x16xf32, #tpu.memory_space<vmem>>, vector<1x16xf32>
    %cst_12 = arith.constant dense<0.000000e+00> : vector<16x16xf32>
    %16 = tpu.matmul %13, %14, %cst_12 {dimension_numbers = #tpu.dot_dimension_numbers<[1], [0], [0], [1], [0, 0, 1, 1], [], []>, precision = #tpu.contract_precision<fp32>} : vector<16x128xf32>, vector<128x16xf32>, vector<16x16xf32> -> vector<16x16xf32>
    %17 = vector.broadcast %15 : vector<1x16xf32> to vector<16x16xf32>
    %18 = arith.addf %16, %17 : vector<16x16xf32>
    %c0_13 = arith.constant 0 : index
    %c0_14 = arith.constant 0 : index
    %19 = vector.load %arg6[%c0_13, %c0_14] : memref<16x16xf32, #tpu.memory_space<vmem>>, vector<16x16xf32>
    tpu.vector_store %arg6[%c0_13, %c0_14], %18 {strides = array<i32>} : memref<16x16xf32, #tpu.memory_space<vmem>>, vector<16x16xf32>,
    return
  }
  func.func @transform_0(%arg0: i32) -> (i32, i32) {
    %c0_i32 = arith.constant 0 : i32
    %c0_i32_0 = arith.constant 0 : i32
    return %arg0, %c0_i32 : i32, i32
  }
  func.func @transform_1(%arg0: i32) -> (i32, i32) {
    %c0_i32 = arith.constant 0 : i32
    %c0_i32_0 = arith.constant 0 : i32
    %c0_i32_1 = arith.constant 0 : i32
    return %c0_i32, %c0_i32_0 : i32, i32
  }
  func.func @transform_2(%arg0: i32) -> (i32, i32) {
    %c0_i32 = arith.constant 0 : i32
    %c0_i32_0 = arith.constant 0 : i32
    %c0_i32_1 = arith.constant 0 : i32
    return %c0_i32, %c0_i32_0 : i32, i32
  }
  func.func @transform_3(%arg0: i32) -> (i32, i32) {
    %c0_i32 = arith.constant 0 : i32
    %c0_i32_0 = arith.constant 0 : i32
    %c0_i32_1 = arith.constant 0 : i32
    return %c0_i32, %c0_i32_0 : i32, i32
  }
  func.func @transform_4(%arg0: i32) -> (i32, i32) {
    %c0_i32 = arith.constant 0 : i32
    %c0_i32_0 = arith.constant 0 : i32
    %c0_i32_1 = arith.constant 0 : i32
    return %c0_i32, %c0_i32_0 : i32, i32
  }
  func.func @transform_5(%arg0: i32) -> (i32, i32) {
    %c0_i32 = arith.constant 0 : i32
    %c0_i32_0 = arith.constant 0 : i32
    return %arg0, %c0_i32 : i32, i32
  }
}

module attributes {stable_mosaic.version = 11 : i64} {
  func.func @_fused_mlp_kernel(%arg0: i32, %arg1: memref<16x32xf32, #tpu.memory_space<vmem>>, %arg2: memref<32x128xf32, #tpu.memory_space<vmem>>, %arg3: memref<1x128xf32, #tpu.memory_space<vmem>>, %arg4: memref<128x16xf32, #tpu.memory_space<vmem>>, %arg5: memref<1x16xf32, #tpu.memory_space<vmem>>, %arg6: memref<16x16xf32, #tpu.memory_space<vmem>>) attributes {dimension_semantics = [#tpu.dimension_semantics<arbitrary>], iteration_bounds = array<i64: 1>, scalar_prefetch = 0 : i64, scratch_operands = 0 : i64, tpu.core_type = #tpu.core_type<tc>, window_params = [{transform_indices = @transform_0, window_bounds = array<i64: 16, 32>}, {pipeline_mode = #tpu.pipeline_mode<synchronous>, transform_indices = @transform_1, window_bounds = array<i64: 32, 128>}, {pipeline_mode = #tpu.pipeline_mode<synchronous>, transform_indices = @transform_2, window_bounds = array<i64: 1, 128>}, {pipeline_mode = #tpu.pipeline_mode<synchronous>, transform_indices = @transform_3, window_bounds = array<i64: 128, 16>}, {pipeline_mode = #tpu.pipeline_mode<synchronous>, transform_indices = @transform_4, window_bounds = array<i64: 1, 16>}, {transform_indices = @transform_5, window_bounds = array<i64: 16, 16>}]} {
    %c0 = arith.constant 0 : index
    %c0_0 = arith.constant 0 : index
    %0 = vector.load %arg1[%c0, %c0_0] : memref<16x32xf32, #tpu.memory_space<vmem>>, vector<16x32xf32>
    %c0_1 = arith.constant 0 : index
    %c0_2 = arith.constant 0 : index
    %1 = vector.load %arg2[%c0_1, %c0_2] : memref<32x128xf32, #tpu.memory_space<vmem>>, vector<32x128xf32>
    %c0_3 = arith.constant 0 : index
    %c0_4 = arith.constant 0 : index
    %2 = vector.load %arg3[%c0_3, %c0_4] : memref<1x128xf32, #tpu.memory_space<vmem>>, vector<1x128xf32>
    %cst = arith.constant dense<0.000000e+00> : vector<16x128xf32>
    %3 = tpu.matmul %0, %1, %cst {dimension_numbers = #tpu.dot_dimension_numbers<[1], [0], [0], [1], [0, 0, 1, 1], [], []>, precision = #tpu.contract_precision<fp32>} : vector<16x32xf32>, vector<32x128xf32>, vector<16x128xf32> -> vector<16x128xf32>
    %4 = vector.broadcast %2 : vector<1x128xf32> to vector<16x128xf32>
    %5 = arith.addf %3, %4 : vector<16x128xf32>
    %cst_5 = arith.constant 5.000000e-01 : f32
    %6 = vector.broadcast %cst_5 : f32 to vector<16x128xf32>
    %7 = arith.mulf %6, %5 : vector<16x128xf32>
    %cst_6 = arith.constant 0.707106769 : f32
    %8 = vector.broadcast %cst_6 : f32 to vector<16x128xf32>
    %9 = arith.mulf %5, %8 : vector<16x128xf32>
    %10 = math.erf %9 : vector<16x128xf32>
    %cst_7 = arith.constant 1.000000e+00 : f32
    %11 = vector.broadcast %cst_7 : f32 to vector<16x128xf32>
    %12 = arith.addf %11, %10 : vector<16x128xf32>
    %13 = arith.mulf %7, %12 : vector<16x128xf32>
    %c0_8 = arith.constant 0 : index
    %c0_9 = arith.constant 0 : index
    %14 = vector.load %arg4[%c0_8, %c0_9] : memref<128x16xf32, #tpu.memory_space<vmem>>, vector<128x16xf32>
    %c0_10 = arith.constant 0 : index
    %c0_11 = arith.constant 0 : index
    %15 = vector.load %arg5[%c0_10, %c0_11] : memref<1x16xf32, #tpu.memory_space<vmem>>, vector<1x16xf32>
    %cst_12 = arith.constant dense<0.000000e+00> : vector<16x16xf32>
    %16 = tpu.matmul %13, %14, %cst_12 {dimension_numbers = #tpu.dot_dimension_numbers<[1], [0], [0], [1], [0, 0, 1, 1], [], []>, precision = #tpu.contract_precision<fp32>} : vector<16x128xf32>, vector<128x16xf32>, vector<16x16xf32> -> vector<16x16xf32>
    %17 = vector.broadcast %15 : vector<1x16xf32> to vector<16x16xf32>
    %18 = arith.addf %16, %17 : vector<16x16xf32>
    %c0_13 = arith.constant 0 : index
    %c0_14 = arith.constant 0 : index
    %19 = vector.load %arg6[%c0_13, %c0_14] : memref<16x16xf32, #tpu.memory_space<vmem>>, vector<16x16xf32>
    tpu.vector_store %arg6[%c0_13, %c0_14], %18 {strides = array<i32>} : memref<16x16xf32, #tpu.memory_space<vmem>>, vector<16x16xf32>,
    return
  }
  func.func @transform_0(%arg0: i32) -> (i32, i32) {
    %c0_i32 = arith.constant 0 : i32
    %c0_i32_0 = arith.constant 0 : i32
    return %arg0, %c0_i32 : i32, i32
  }
  func.func @transform_1(%arg0: i32) -> (i32, i32) {
    %c0_i32 = arith.constant 0 : i32
    %c0_i32_0 = arith.constant 0 : i32
    %c0_i32_1 = arith.constant 0 : i32
    return %c0_i32, %c0_i32_0 : i32, i32
  }
  func.func @transform_2(%arg0: i32) -> (i32, i32) {
    %c0_i32 = arith.constant 0 : i32
    %c0_i32_0 = arith.constant 0 : i32
    %c0_i32_1 = arith.constant 0 : i32
    return %c0_i32, %c0_i32_0 : i32, i32
  }
  func.func @transform_3(%arg0: i32) -> (i32, i32) {
    %c0_i32 = arith.constant 0 : i32
    %c0_i32_0 = arith.constant 0 : i32
    %c0_i32_1 = arith.constant 0 : i32
    return %c0_i32, %c0_i32_0 : i32, i32
  }
  func.func @transform_4(%arg0: i32) -> (i32, i32) {
    %c0_i32 = arith.constant 0 : i32
    %c0_i32_0 = arith.constant 0 : i32
    %c0_i32_1 = arith.constant 0 : i32
    return %c0_i32, %c0_i32_0 : i32, i32
  }
  func.func @transform_5(%arg0: i32) -> (i32, i32) {
    %c0_i32 = arith.constant 0 : i32
    %c0_i32_0 = arith.constant 0 : i32
    return %arg0, %c0_i32 : i32, i32
  }
}

</mosaic_0001>

<llo_original>
// kernel: tpu_custom_call.1
$region0: #{tpu_custom_call.1}
  #allocation0 [shape = 'u32[]', space=smem, size = 0x4, offset = 0x4, fixed_abs, tag = 'smem constant byte address 0x4 - core index']
  #allocation1 [shape = 'u32[72,128]{1,0:T(1,128)}', space=vmem, size = 0x9000, scoped, tag = 'internal scratch']
  %s0 = inlined_call_operand.vmem [shape: f32[16,32], index: 0, kind: input, shape index: {}]
  %s1 = inlined_call_operand.vmem [shape: f32[32,128], index: 1, kind: input, shape index: {}]
  %s2 = inlined_call_operand.vmem [shape: f32[1,128], index: 2, kind: input, shape index: {}]
  %s3 = inlined_call_operand.vmem [shape: f32[128,16], index: 3, kind: input, shape index: {}]
  %s4 = inlined_call_operand.vmem [shape: f32[1,16], index: 4, kind: input, shape index: {}]
  %s5 = inlined_call_operand.hbm [shape: f32[16,16], index: 5, kind: output, shape index: {}]
  %s6 = sld [smem:[#allocation0]]
  $region30: #{tpu_custom_call.1} parent=0
    _
  %s8 = ssub.s32 1, %s6
  %s9 = scalar_select 0, %s8, %s6
  $region1: #{tpu_custom_call.1} parent=0
    #allocation2 [shape = 'u8[8192]{0}', space=vmem, size = 0x2000, scoped, tag = 'output window, operand 0, single buffered']
    #allocation3 [shape = 's32[1]{0}', space=sflag, size = 0x4, scoped, tag = 'scoped memory for tpu_custom_call.1']
    %10 = vsyncpa [#allocation3], 0
    // Predicated region
    $region2: #{tpu_custom_call.1} parent=1 // pred_check
      _
    $region3: #{tpu_custom_call.1} parent=1 // pred_check_branch
      %12 = sbr.rel (0) target = $region5
    $region4: #{tpu_custom_call.1} parent=1 // pred_region
      _
    $region5: #{tpu_custom_call.1} parent=1 // pred_fallthru
      _
    // Predicated region
    $region6: #{tpu_custom_call.1} parent=1 // pred_check
      _
    $region7: #{tpu_custom_call.1} parent=1 // pred_check_branch
      %14 = sbr.rel (0) target = $region9
    $region8: #{tpu_custom_call.1} parent=1 // pred_region
      _
    $region9: #{tpu_custom_call.1} parent=1 // pred_fallthru
      _
    // Predicated region
    $region10: #{tpu_custom_call.1} parent=1 // pred_check
      _
    $region11: #{tpu_custom_call.1} parent=1 // pred_check_branch
      %16 = sbr.rel (0) target = $region13
    $region12: #{tpu_custom_call.1} parent=1 // pred_region
      _
    $region13: #{tpu_custom_call.1} parent=1 // pred_fallthru
      _
    // Predicated region
    $region14: #{tpu_custom_call.1} parent=1 // pred_check
      _
    $region15: #{tpu_custom_call.1} parent=1 // pred_check_branch
      %18 = sbr.rel (0) target = $region17
    $region16: #{tpu_custom_call.1} parent=1 // pred_region
      _
    $region17: #{tpu_custom_call.1} parent=1 // pred_fallthru
      _
    // Predicated region
    $region18: #{tpu_custom_call.1} parent=1 // pred_check
      _
    $region19: #{tpu_custom_call.1} parent=1 // pred_check_branch
      %20 = sbr.rel (0) target = $region21
    $region20: #{tpu_custom_call.1} parent=1 // pred_region
      _
    $region21: #{tpu_custom_call.1} parent=1 // pred_fallthru
      _
    %v21 = vld [vmem:[%s0] sm:$0xff]
    %v22 = vld [vmem:[%s0 + $0x8] sm:$0xff]
    %v23 = vld [vmem:[%s1] sm:$0xff]
    %v24 = vld [vmem:[%s1 + $0x8] sm:$0xff]
    %v25 = vld [vmem:[%s1 + $0x10] sm:$0xff]
    %v26 = vld [vmem:[%s1 + $0x18] sm:$0xff]
    %v27 = vld [vmem:[%s2] sm:$0x1]
    %v29 = vperm.slane %v27, 0
    %vm31 = vcmask 261120
    %v33 = vsel %vm31, %v21, 0
    %v36 = vsel %vm31, %v22, 0
    %38 = vmatpush.msra.mxu0 0.0
    %39 = vmatpush.msra.mxu0 0.0
    %40 = vmatpush.msra.mxu0 0.0
    %41 = vmatpush.msra.mxu0 0.0
    %42 = vmatpush.msra.mxu0 0.0
    %43 = vmatpush.msra.mxu0 0.0
    %44 = vmatpush.msra.mxu0 0.0
    %45 = vmatpush.msra.mxu0 0.0
    %46 = vmatpush.msra.mxu0 0.0
    %47 = vmatpush.msra.mxu0 0.0
    %48 = vmatpush.msra.mxu0 0.0
    %49 = vmatpush.msra.mxu0 0.0
    %v50 = vand.u32 %v26, 4294901760
    %51 = vmatpush.msra.mxu0 %v50
    %v52 = vand.u32 %v25, 4294901760
    %53 = vmatpush.msra.mxu0 %v52
    %v54 = vand.u32 %v24, 4294901760
    %55 = vmatpush.msra.mxu0 %v54
    %v56 = vand.u32 %v23, 4294901760
    %57 = vmatpush.msra.mxu0 %v56
    %v58 = vand.u32 %v33, 4294901760
    %v59 = vsub.f32 %v33, %v58
    %v60 = vand.u32 %v59, 4294901760
    %v61 = vsub.f32 %v59, %v60
    %v62 = vand.u32 %v61, 4294901760
    %63 = vmatmul.f32.gmra.mxu0 %v62
    %v64 = vpop.f32.mrf.mxu0
    %v65 = vadd.f32 %v29, %v64
    %v66 = vand.u32 %v36, 4294901760
    %v67 = vsub.f32 %v36, %v66
    %v68 = vand.u32 %v67, 4294901760
    %v69 = vsub.f32 %v67, %v68
    %v70 = vand.u32 %v69, 4294901760
    %71 = vmatmul.f32.gmra.mxu0 %v70
    %v72 = vpop.f32.mrf.mxu0
    %v73 = vadd.f32 %v29, %v72
    %74 = vdwg.mxu0
    %75 = vmatpush.msra.mxu0 0.0
    %76 = vmatpush.msra.mxu0 0.0
    %77 = vmatpush.msra.mxu0 0.0
    %78 = vmatpush.msra.mxu0 0.0
    %79 = vmatpush.msra.mxu0 0.0
    %80 = vmatpush.msra.mxu0 0.0
    %81 = vmatpush.msra.mxu0 0.0
    %82 = vmatpush.msra.mxu0 0.0
    %83 = vmatpush.msra.mxu0 0.0
    %84 = vmatpush.msra.mxu0 0.0
    %85 = vmatpush.msra.mxu0 0.0
    %86 = vmatpush.msra.mxu0 0.0
    %v87 = vand.u32 %v26, 4294901760
    %v88 = vsub.f32 %v26, %v87
    %v89 = vand.u32 %v88, 4294901760
    %v90 = vsub.f32 %v88, %v89
    %v91 = vand.u32 %v90, 4294901760
    %92 = vmatpush.msra.mxu0 %v91
    %v93 = vand.u32 %v25, 4294901760
    %v94 = vsub.f32 %v25, %v93
    %v95 = vand.u32 %v94, 4294901760
    %v96 = vsub.f32 %v94, %v95
    %v97 = vand.u32 %v96, 4294901760
    %98 = vmatpush.msra.mxu0 %v97
    %v99 = vand.u32 %v24, 4294901760
    %v100 = vsub.f32 %v24, %v99
    %v101 = vand.u32 %v100, 4294901760
    %v102 = vsub.f32 %v100, %v101
    %v103 = vand.u32 %v102, 4294901760
    %104 = vmatpush.msra.mxu0 %v103
    %v105 = vand.u32 %v23, 4294901760
    %v106 = vsub.f32 %v23, %v105
    %v107 = vand.u32 %v106, 4294901760
    %v108 = vsub.f32 %v106, %v107
    %v109 = vand.u32 %v108, 4294901760
    %110 = vmatpush.msra.mxu0 %v109
    %v111 = vand.u32 %v33, 4294901760
    %112 = vmatmul.f32.gmra.mxu0 %v111
    %v113 = vpop.f32.mrf.mxu0
    %v114 = vadd.f32 %v65, %v113
    %v115 = vand.u32 %v36, 4294901760
    %116 = vmatmul.f32.gmra.mxu0 %v115
    %v117 = vpop.f32.mrf.mxu0
    %v118 = vadd.f32 %v73, %v117
    %119 = vdwg.mxu0
    %120 = vmatpush.msra.mxu0 0.0
    %121 = vmatpush.msra.mxu0 0.0
    %122 = vmatpush.msra.mxu0 0.0
    %123 = vmatpush.msra.mxu0 0.0
    %124 = vmatpush.msra.mxu0 0.0
    %125 = vmatpush.msra.mxu0 0.0
    %126 = vmatpush.msra.mxu0 0.0
    %127 = vmatpush.msra.mxu0 0.0
    %128 = vmatpush.msra.mxu0 0.0
    %129 = vmatpush.msra.mxu0 0.0
    %130 = vmatpush.msra.mxu0 0.0
    %131 = vmatpush.msra.mxu0 0.0
    %v132 = vand.u32 %v26, 4294901760
    %v133 = vsub.f32 %v26, %v132
    %134 = vmatpush.msra.mxu0 %v133
    %v135 = vand.u32 %v25, 4294901760
    %v136 = vsub.f32 %v25, %v135
    %137 = vmatpush.msra.mxu0 %v136
    %v138 = vand.u32 %v24, 4294901760
    %v139 = vsub.f32 %v24, %v138
    %140 = vmatpush.msra.mxu0 %v139
    %v141 = vand.u32 %v23, 4294901760
    %v142 = vsub.f32 %v23, %v141
    %143 = vmatpush.msra.mxu0 %v142
    %v144 = vand.u32 %v33, 4294901760
    %v145 = vsub.f32 %v33, %v144
    %146 = vmatmul.f32.gmra.mxu0 %v145
    %v147 = vpop.f32.mrf.mxu0
    %v148 = vadd.f32 %v114, %v147
    %v149 = vand.u32 %v36, 4294901760
    %v150 = vsub.f32 %v36, %v149
    %151 = vmatmul.f32.gmra.mxu0 %v150
    %v152 = vpop.f32.mrf.mxu0
    %v153 = vadd.f32 %v118, %v152
    %154 = vdwg.mxu0
    %155 = vmatpush.msra.mxu0 0.0
    %156 = vmatpush.msra.mxu0 0.0
    %157 = vmatpush.msra.mxu0 0.0
    %158 = vmatpush.msra.mxu0 0.0
    %159 = vmatpush.msra.mxu0 0.0
    %160 = vmatpush.msra.mxu0 0.0
    %161 = vmatpush.msra.mxu0 0.0
    %162 = vmatpush.msra.mxu0 0.0
    %163 = vmatpush.msra.mxu0 0.0
    %164 = vmatpush.msra.mxu0 0.0
    %165 = vmatpush.msra.mxu0 0.0
    %166 = vmatpush.msra.mxu0 0.0
    %v167 = vand.u32 %v26, 4294901760
    %168 = vmatpush.msra.mxu0 %v167
    %v169 = vand.u32 %v25, 4294901760
    %170 = vmatpush.msra.mxu0 %v169
    %v171 = vand.u32 %v24, 4294901760
    %172 = vmatpush.msra.mxu0 %v171
    %v173 = vand.u32 %v23, 4294901760
    %174 = vmatpush.msra.mxu0 %v173
    %v175 = vand.u32 %v33, 4294901760
    %v176 = vsub.f32 %v33, %v175
    %v177 = vand.u32 %v176, 4294901760
    %178 = vmatmul.f32.gmra.mxu0 %v177
    %v179 = vpop.f32.mrf.mxu0
    %v180 = vadd.f32 %v148, %v179
    %v181 = vand.u32 %v36, 4294901760
    %v182 = vsub.f32 %v36, %v181
    %v183 = vand.u32 %v182, 4294901760
    %184 = vmatmul.f32.gmra.mxu0 %v183
    %v185 = vpop.f32.mrf.mxu0
    %v186 = vadd.f32 %v153, %v185
    %187 = vdwg.mxu0
    %188 = vmatpush.msra.mxu0 0.0
    %189 = vmatpush.msra.mxu0 0.0
    %190 = vmatpush.msra.mxu0 0.0
    %191 = vmatpush.msra.mxu0 0.0
    %192 = vmatpush.msra.mxu0 0.0
    %193 = vmatpush.msra.mxu0 0.0
    %194 = vmatpush.msra.mxu0 0.0
    %195 = vmatpush.msra.mxu0 0.0
    %196 = vmatpush.msra.mxu0 0.0
    %197 = vmatpush.msra.mxu0 0.0
    %198 = vmatpush.msra.mxu0 0.0
    %199 = vmatpush.msra.mxu0 0.0
    %v200 = vand.u32 %v26, 4294901760
    %v201 = vsub.f32 %v26, %v200
    %v202 = vand.u32 %v201, 4294901760
    %203 = vmatpush.msra.mxu0 %v202
    %v204 = vand.u32 %v25, 4294901760
    %v205 = vsub.f32 %v25, %v204
    %v206 = vand.u32 %v205, 4294901760
    %207 = vmatpush.msra.mxu0 %v206
    %v208 = vand.u32 %v24, 4294901760
    %v209 = vsub.f32 %v24, %v208
    %v210 = vand.u32 %v209, 4294901760
    %211 = vmatpush.msra.mxu0 %v210
    %v212 = vand.u32 %v23, 4294901760
    %v213 = vsub.f32 %v23, %v212
    %v214 = vand.u32 %v213, 4294901760
    %215 = vmatpush.msra.mxu0 %v214
    %v216 = vand.u32 %v33, 4294901760
    %217 = vmatmul.f32.gmra.mxu0 %v216
    %v218 = vpop.f32.mrf.mxu0
    %v219 = vadd.f32 %v180, %v218
    %v220 = vand.u32 %v36, 4294901760
    %221 = vmatmul.f32.gmra.mxu0 %v220
    %v222 = vpop.f32.mrf.mxu0
    %v223 = vadd.f32 %v186, %v222
    %224 = vdwg.mxu0
    %225 = vmatpush.msra.mxu0 0.0
    %226 = vmatpush.msra.mxu0 0.0
    %227 = vmatpush.msra.mxu0 0.0
    %228 = vmatpush.msra.mxu0 0.0
    %229 = vmatpush.msra.mxu0 0.0
    %230 = vmatpush.msra.mxu0 0.0
    %231 = vmatpush.msra.mxu0 0.0
    %232 = vmatpush.msra.mxu0 0.0
    %233 = vmatpush.msra.mxu0 0.0
    %234 = vmatpush.msra.mxu0 0.0
    %235 = vmatpush.msra.mxu0 0.0
    %236 = vmatpush.msra.mxu0 0.0
    %v237 = vand.u32 %v26, 4294901760
    %238 = vmatpush.msra.mxu0 %v237
    %v239 = vand.u32 %v25, 4294901760
    %240 = vmatpush.msra.mxu0 %v239
    %v241 = vand.u32 %v24, 4294901760
    %242 = vmatpush.msra.mxu0 %v241
    %v243 = vand.u32 %v23, 4294901760
    %244 = vmatpush.msra.mxu0 %v243
    %v245 = vand.u32 %v33, 4294901760
    %246 = vmatmul.f32.gmra.mxu0 %v245
    %v247 = vpop.f32.mrf.mxu0
    %v248 = vadd.f32 %v219, %v247
    %v249 = vand.u32 %v36, 4294901760
    %250 = vmatmul.f32.gmra.mxu0 %v249
    %v251 = vpop.f32.mrf.mxu0
    %v252 = vadd.f32 %v223, %v251
    %253 = vdwg.mxu0
    %v254 = vmul.f32 %v248, 0.5
    %v255 = vmul.f32 %v252, 0.5
    %v256 = vmul.f32 %v248, 0.70710677
    %v257 = vmul.f32 %v252, 0.70710677
    %v258 = vmul.f32 %v256, %v256
    %v259 = vmin.f32 16.0, %v258
    %v260 = vmul.f32 %v259, 2.1237322e-06
    %v261 = vadd.f32 %v260, 0.00028619796
    %v262 = vmul.f32 %v259, %v261
    %v263 = vadd.f32 %v262, 0.0036580483
    %v264 = vmul.f32 %v259, %v263
    %v265 = vadd.f32 %v264, 0.05243302
    %v266 = vmul.f32 %v259, %v265
    %v267 = vadd.f32 %v266, 0.18741608
    %v268 = vmul.f32 %v259, %v267
    %v269 = vadd.f32 %v268, 1.1283791
    %v270 = vmul.f32 %v256, %v269
    %v271 = vmul.f32 %v259, 3.8918573e-05
    %v272 = vadd.f32 %v271, 0.001143296
    %v273 = vmul.f32 %v259, %v272
    %v274 = vadd.f32 %v273, 0.014752088
    %v275 = vmul.f32 %v259, %v274
    %v276 = vadd.f32 %v275, 0.112945676
    %v277 = vmul.f32 %v259, %v276
    %v278 = vadd.f32 %v277, 0.4994258
    %v279 = vmul.f32 %v259, %v278
    %v280 = vadd.f32 %v279, 1.0
    %v281 = vrcp.pop %v280
    %v282 = vmul.f32 %v280, %v281
    %v283 = vsub.f32 1.0, %v282
    %v284 = vmul.f32 %v281, %v283
    %v285 = vadd.f32 %v281, %v284
    %vm286 = vweird.f32 %v280
    %vm287 = vweird.f32 %v281
    %vm288 = vmor %vm286, %vm287
    %v289 = vsel %vm288, %v281, %v285
    %v290 = vand.u32 2147483647, %v280
    %vm291 = vcmp.eq.f32.partialorder %v290, 8.507059e+37
    %v292 = vand.u32 %v280, 2147483648
    %v293 = vor.u32 1.1754944e-38, %v292
    %v294 = vsel %vm291, %v293, %v289
    %v295 = vmul.f32 %v270, %v294
    %v296 = vmin.f32 %v295, 1.0
    %v297 = vmax.f32 %v296, -1.0
    %v298 = vmul.f32 %v257, %v257
    %v299 = vmin.f32 16.0, %v298
    %v300 = vmul.f32 %v299, 2.1237322e-06
    %v301 = vadd.f32 %v300, 0.00028619796
    %v302 = vmul.f32 %v299, %v301
    %v303 = vadd.f32 %v302, 0.0036580483
    %v304 = vmul.f32 %v299, %v303
    %v305 = vadd.f32 %v304, 0.05243302
    %v306 = vmul.f32 %v299, %v305
    %v307 = vadd.f32 %v306, 0.18741608
    %v308 = vmul.f32 %v299, %v307
    %v309 = vadd.f32 %v308, 1.1283791
    %v310 = vmul.f32 %v257, %v309
    %v311 = vmul.f32 %v299, 3.8918573e-05
    %v312 = vadd.f32 %v311, 0.001143296
    %v313 = vmul.f32 %v299, %v312
    %v314 = vadd.f32 %v313, 0.014752088
    %v315 = vmul.f32 %v299, %v314
    %v316 = vadd.f32 %v315, 0.112945676
    %v317 = vmul.f32 %v299, %v316
    %v318 = vadd.f32 %v317, 0.4994258
    %v319 = vmul.f32 %v299, %v318
    %v320 = vadd.f32 %v319, 1.0
    %v321 = vrcp.pop %v320
    %v322 = vmul.f32 %v320, %v321
    %v323 = vsub.f32 1.0, %v322
    %v324 = vmul.f32 %v321, %v323
    %v325 = vadd.f32 %v321, %v324
    %vm326 = vweird.f32 %v320
    %vm327 = vweird.f32 %v321
    %vm328 = vmor %vm326, %vm327
    %v329 = vsel %vm328, %v321, %v325
    %v330 = vand.u32 2147483647, %v320
    %vm331 = vcmp.eq.f32.partialorder %v330, 8.507059e+37
    %v332 = vand.u32 %v320, 2147483648
    %v333 = vor.u32 1.1754944e-38, %v332
    %v334 = vsel %vm331, %v333, %v329
    %v335 = vmul.f32 %v310, %v334
    %v336 = vmin.f32 %v335, 1.0
    %v337 = vmax.f32 %v336, -1.0
    %v338 = vadd.f32 %v297, 1.0
    %v339 = vadd.f32 %v337, 1.0
    %v340 = vmul.f32 %v254, %v338
    %v341 = vmul.f32 %v255, %v339
    %v342 = vld [vmem:[%s3] sm:$0xff]
    %v343 = vld [vmem:[%s3 + $0x8] sm:$0xff]
    %v344 = vld [vmem:[%s3 + $0x10] sm:$0xff]
    %v345 = vld [vmem:[%s3 + $0x18] sm:$0xff]
    %v346 = vld [vmem:[%s3 + $0x20] sm:$0xff]
    %v347 = vld [vmem:[%s3 + $0x28] sm:$0xff]
    %v348 = vld [vmem:[%s3 + $0x30] sm:$0xff]
    %v349 = vld [vmem:[%s3 + $0x38] sm:$0xff]
    %v350 = vld [vmem:[%s3 + $0x40] sm:$0xff]
    %v351 = vld [vmem:[%s3 + $0x48] sm:$0xff]
    %v352 = vld [vmem:[%s3 + $0x50] sm:$0xff]
    %v353 = vld [vmem:[%s3 + $0x58] sm:$0xff]
    %v354 = vld [vmem:[%s3 + $0x60] sm:$0xff]
    %v355 = vld [vmem:[%s3 + $0x68] sm:$0xff]
    %v356 = vld [vmem:[%s3 + $0x70] sm:$0xff]
    %v357 = vld [vmem:[%s3 + $0x78] sm:$0xff]
    %v358 = vld [vmem:[%s4] sm:$0x1]
    %v360 = vperm.slane %v358, 0
    %v362 = vand.u32 %v357, 4294901760
    %363 = vmatpush.msra.mxu0 %v362
    %v364 = vand.u32 %v356, 4294901760
    %365 = vmatpush.msra.mxu0 %v364
    %v366 = vand.u32 %v355, 4294901760
    %367 = vmatpush.msra.mxu0 %v366
    %v368 = vand.u32 %v354, 4294901760
    %369 = vmatpush.msra.mxu0 %v368
    %v370 = vand.u32 %v353, 4294901760
    %371 = vmatpush.msra.mxu0 %v370
    %v372 = vand.u32 %v352, 4294901760
    %373 = vmatpush.msra.mxu0 %v372
    %v374 = vand.u32 %v351, 4294901760
    %375 = vmatpush.msra.mxu0 %v374
    %v376 = vand.u32 %v350, 4294901760
    %377 = vmatpush.msra.mxu0 %v376
    %v378 = vand.u32 %v349, 4294901760
    %379 = vmatpush.msra.mxu0 %v378
    %v380 = vand.u32 %v348, 4294901760
    %381 = vmatpush.msra.mxu0 %v380
    %v382 = vand.u32 %v347, 4294901760
    %383 = vmatpush.msra.mxu0 %v382
    %v384 = vand.u32 %v346, 4294901760
    %385 = vmatpush.msra.mxu0 %v384
    %v386 = vand.u32 %v345, 4294901760
    %387 = vmatpush.msra.mxu0 %v386
    %v388 = vand.u32 %v344, 4294901760
    %389 = vmatpush.msra.mxu0 %v388
    %v390 = vand.u32 %v343, 4294901760
    %391 = vmatpush.msra.mxu0 %v390
    %v392 = vand.u32 %v342, 4294901760
    %393 = vmatpush.msra.mxu0 %v392
    %v394 = vand.u32 %v340, 4294901760
    %v395 = vsub.f32 %v340, %v394
    %v396 = vand.u32 %v395, 4294901760
    %v397 = vsub.f32 %v395, %v396
    %v398 = vand.u32 %v397, 4294901760
    %399 = vmatmul.f32.gmra.mxu0 %v398
    %v400 = vpop.f32.mrf.mxu0
    %v401 = vadd.f32 %v360, %v400
    %v402 = vand.u32 %v341, 4294901760
    %v403 = vsub.f32 %v341, %v402
    %v404 = vand.u32 %v403, 4294901760
    %v405 = vsub.f32 %v403, %v404
    %v406 = vand.u32 %v405, 4294901760
    %407 = vmatmul.f32.gmra.mxu0 %v406
    %v408 = vpop.f32.mrf.mxu0
    %v409 = vadd.f32 %v360, %v408
    %410 = vdwg.mxu0
    %v411 = vand.u32 %v357, 4294901760
    %v412 = vsub.f32 %v357, %v411
    %v413 = vand.u32 %v412, 4294901760
    %v414 = vsub.f32 %v412, %v413
    %v415 = vand.u32 %v414, 4294901760
    %416 = vmatpush.msra.mxu0 %v415
    %v417 = vand.u32 %v356, 4294901760
    %v418 = vsub.f32 %v356, %v417
    %v419 = vand.u32 %v418, 4294901760
    %v420 = vsub.f32 %v418, %v419
    %v421 = vand.u32 %v420, 4294901760
    %422 = vmatpush.msra.mxu0 %v421
    %v423 = vand.u32 %v355, 4294901760
    %v424 = vsub.f32 %v355, %v423
    %v425 = vand.u32 %v424, 4294901760
    %v426 = vsub.f32 %v424, %v425
    %v427 = vand.u32 %v426, 4294901760
    %428 = vmatpush.msra.mxu0 %v427
    %v429 = vand.u32 %v354, 4294901760
    %v430 = vsub.f32 %v354, %v429
    %v431 = vand.u32 %v430, 4294901760
    %v432 = vsub.f32 %v430, %v431
    %v433 = vand.u32 %v432, 4294901760
    %434 = vmatpush.msra.mxu0 %v433
    %v435 = vand.u32 %v353, 4294901760
    %v436 = vsub.f32 %v353, %v435
    %v437 = vand.u32 %v436, 4294901760
    %v438 = vsub.f32 %v436, %v437
    %v439 = vand.u32 %v438, 4294901760
    %440 = vmatpush.msra.mxu0 %v439
    %v441 = vand.u32 %v352, 4294901760
    %v442 = vsub.f32 %v352, %v441
    %v443 = vand.u32 %v442, 4294901760
    %v444 = vsub.f32 %v442, %v443
    %v445 = vand.u32 %v444, 4294901760
    %446 = vmatpush.msra.mxu0 %v445
    %v447 = vand.u32 %v351, 4294901760
    %v448 = vsub.f32 %v351, %v447
    %v449 = vand.u32 %v448, 4294901760
    %v450 = vsub.f32 %v448, %v449
    %v451 = vand.u32 %v450, 4294901760
    %452 = vmatpush.msra.mxu0 %v451
    %v453 = vand.u32 %v350, 4294901760
    %v454 = vsub.f32 %v350, %v453
    %v455 = vand.u32 %v454, 4294901760
    %v456 = vsub.f32 %v454, %v455
    %v457 = vand.u32 %v456, 4294901760
    %458 = vmatpush.msra.mxu0 %v457
    %v459 = vand.u32 %v349, 4294901760
    %v460 = vsub.f32 %v349, %v459
    %v461 = vand.u32 %v460, 4294901760
    %v462 = vsub.f32 %v460, %v461
    %v463 = vand.u32 %v462, 4294901760
    %464 = vmatpush.msra.mxu0 %v463
    %v465 = vand.u32 %v348, 4294901760
    %v466 = vsub.f32 %v348, %v465
    %v467 = vand.u32 %v466, 4294901760
    %v468 = vsub.f32 %v466, %v467
    %v469 = vand.u32 %v468, 4294901760
    %470 = vmatpush.msra.mxu0 %v469
    %v471 = vand.u32 %v347, 4294901760
    %v472 = vsub.f32 %v347, %v471
    %v473 = vand.u32 %v472, 4294901760
    %v474 = vsub.f32 %v472, %v473
    %v475 = vand.u32 %v474, 4294901760
    %476 = vmatpush.msra.mxu0 %v475
    %v477 = vand.u32 %v346, 4294901760
    %v478 = vsub.f32 %v346, %v477
    %v479 = vand.u32 %v478, 4294901760
    %v480 = vsub.f32 %v478, %v479
    %v481 = vand.u32 %v480, 4294901760
    %482 = vmatpush.msra.mxu0 %v481
    %v483 = vand.u32 %v345, 4294901760
    %v484 = vsub.f32 %v345, %v483
    %v485 = vand.u32 %v484, 4294901760
    %v486 = vsub.f32 %v484, %v485
    %v487 = vand.u32 %v486, 4294901760
    %488 = vmatpush.msra.mxu0 %v487
    %v489 = vand.u32 %v344, 4294901760
    %v490 = vsub.f32 %v344, %v489
    %v491 = vand.u32 %v490, 4294901760
    %v492 = vsub.f32 %v490, %v491
    %v493 = vand.u32 %v492, 4294901760
    %494 = vmatpush.msra.mxu0 %v493
    %v495 = vand.u32 %v343, 4294901760
    %v496 = vsub.f32 %v343, %v495
    %v497 = vand.u32 %v496, 4294901760
    %v498 = vsub.f32 %v496, %v497
    %v499 = vand.u32 %v498, 4294901760
    %500 = vmatpush.msra.mxu0 %v499
    %v501 = vand.u32 %v342, 4294901760
    %v502 = vsub.f32 %v342, %v501
    %v503 = vand.u32 %v502, 4294901760
    %v504 = vsub.f32 %v502, %v503
    %v505 = vand.u32 %v504, 4294901760
    %506 = vmatpush.msra.mxu0 %v505
    %v507 = vand.u32 %v340, 4294901760
    %508 = vmatmul.f32.gmra.mxu0 %v507
    %v509 = vpop.f32.mrf.mxu0
    %v510 = vadd.f32 %v401, %v509
    %v511 = vand.u32 %v341, 4294901760
    %512 = vmatmul.f32.gmra.mxu0 %v511
    %v513 = vpop.f32.mrf.mxu0
    %v514 = vadd.f32 %v409, %v513
    %515 = vdwg.mxu0
    %v516 = vand.u32 %v357, 4294901760
    %v517 = vsub.f32 %v357, %v516
    %518 = vmatpush.msra.mxu0 %v517
    %v519 = vand.u32 %v356, 4294901760
    %v520 = vsub.f32 %v356, %v519
    %521 = vmatpush.msra.mxu0 %v520
    %v522 = vand.u32 %v355, 4294901760
    %v523 = vsub.f32 %v355, %v522
    %524 = vmatpush.msra.mxu0 %v523
    %v525 = vand.u32 %v354, 4294901760
    %v526 = vsub.f32 %v354, %v525
    %527 = vmatpush.msra.mxu0 %v526
    %v528 = vand.u32 %v353, 4294901760
    %v529 = vsub.f32 %v353, %v528
    %530 = vmatpush.msra.mxu0 %v529
    %v531 = vand.u32 %v352, 4294901760
    %v532 = vsub.f32 %v352, %v531
    %533 = vmatpush.msra.mxu0 %v532
    %v534 = vand.u32 %v351, 4294901760
    %v535 = vsub.f32 %v351, %v534
    %536 = vmatpush.msra.mxu0 %v535
    %v537 = vand.u32 %v350, 4294901760
    %v538 = vsub.f32 %v350, %v537
    %539 = vmatpush.msra.mxu0 %v538
    %v540 = vand.u32 %v349, 4294901760
    %v541 = vsub.f32 %v349, %v540
    %542 = vmatpush.msra.mxu0 %v541
    %v543 = vand.u32 %v348, 4294901760
    %v544 = vsub.f32 %v348, %v543
    %545 = vmatpush.msra.mxu0 %v544
    %v546 = vand.u32 %v347, 4294901760
    %v547 = vsub.f32 %v347, %v546
    %548 = vmatpush.msra.mxu0 %v547
    %v549 = vand.u32 %v346, 4294901760
    %v550 = vsub.f32 %v346, %v549
    %551 = vmatpush.msra.mxu0 %v550
    %v552 = vand.u32 %v345, 4294901760
    %v553 = vsub.f32 %v345, %v552
    %554 = vmatpush.msra.mxu0 %v553
    %v555 = vand.u32 %v344, 4294901760
    %v556 = vsub.f32 %v344, %v555
    %557 = vmatpush.msra.mxu0 %v556
    %v558 = vand.u32 %v343, 4294901760
    %v559 = vsub.f32 %v343, %v558
    %560 = vmatpush.msra.mxu0 %v559
    %v561 = vand.u32 %v342, 4294901760
    %v562 = vsub.f32 %v342, %v561
    %563 = vmatpush.msra.mxu0 %v562
    %v564 = vand.u32 %v340, 4294901760
    %v565 = vsub.f32 %v340, %v564
    %566 = vmatmul.f32.gmra.mxu0 %v565
    %v567 = vpop.f32.mrf.mxu0
    %v568 = vadd.f32 %v510, %v567
    %v569 = vand.u32 %v341, 4294901760
    %v570 = vsub.f32 %v341, %v569
    %571 = vmatmul.f32.gmra.mxu0 %v570
    %v572 = vpop.f32.mrf.mxu0
    %v573 = vadd.f32 %v514, %v572
    %574 = vdwg.mxu0
    %v575 = vand.u32 %v357, 4294901760
    %576 = vmatpush.msra.mxu0 %v575
    %v577 = vand.u32 %v356, 4294901760
    %578 = vmatpush.msra.mxu0 %v577
    %v579 = vand.u32 %v355, 4294901760
    %580 = vmatpush.msra.mxu0 %v579
    %v581 = vand.u32 %v354, 4294901760
    %582 = vmatpush.msra.mxu0 %v581
    %v583 = vand.u32 %v353, 4294901760
    %584 = vmatpush.msra.mxu0 %v583
    %v585 = vand.u32 %v352, 4294901760
    %586 = vmatpush.msra.mxu0 %v585
    %v587 = vand.u32 %v351, 4294901760
    %588 = vmatpush.msra.mxu0 %v587
    %v589 = vand.u32 %v350, 4294901760
    %590 = vmatpush.msra.mxu0 %v589
    %v591 = vand.u32 %v349, 4294901760
    %592 = vmatpush.msra.mxu0 %v591
    %v593 = vand.u32 %v348, 4294901760
    %594 = vmatpush.msra.mxu0 %v593
    %v595 = vand.u32 %v347, 4294901760
    %596 = vmatpush.msra.mxu0 %v595
    %v597 = vand.u32 %v346, 4294901760
    %598 = vmatpush.msra.mxu0 %v597
    %v599 = vand.u32 %v345, 4294901760
    %600 = vmatpush.msra.mxu0 %v599
    %v601 = vand.u32 %v344, 4294901760
    %602 = vmatpush.msra.mxu0 %v601
    %v603 = vand.u32 %v343, 4294901760
    %604 = vmatpush.msra.mxu0 %v603
    %v605 = vand.u32 %v342, 4294901760
    %606 = vmatpush.msra.mxu0 %v605
    %v607 = vand.u32 %v340, 4294901760
    %v608 = vsub.f32 %v340, %v607
    %v609 = vand.u32 %v608, 4294901760
    %610 = vmatmul.f32.gmra.mxu0 %v609
    %v611 = vpop.f32.mrf.mxu0
    %v612 = vadd.f32 %v568, %v611
    %v613 = vand.u32 %v341, 4294901760
    %v614 = vsub.f32 %v341, %v613
    %v615 = vand.u32 %v614, 4294901760
    %616 = vmatmul.f32.gmra.mxu0 %v615
    %v617 = vpop.f32.mrf.mxu0
    %v618 = vadd.f32 %v573, %v617
    %619 = vdwg.mxu0
    %v620 = vand.u32 %v357, 4294901760
    %v621 = vsub.f32 %v357, %v620
    %v622 = vand.u32 %v621, 4294901760
    %623 = vmatpush.msra.mxu0 %v622
    %v624 = vand.u32 %v356, 4294901760
    %v625 = vsub.f32 %v356, %v624
    %v626 = vand.u32 %v625, 4294901760
    %627 = vmatpush.msra.mxu0 %v626
    %v628 = vand.u32 %v355, 4294901760
    %v629 = vsub.f32 %v355, %v628
    %v630 = vand.u32 %v629, 4294901760
    %631 = vmatpush.msra.mxu0 %v630
    %v632 = vand.u32 %v354, 4294901760
    %v633 = vsub.f32 %v354, %v632
    %v634 = vand.u32 %v633, 4294901760
    %635 = vmatpush.msra.mxu0 %v634
    %v636 = vand.u32 %v353, 4294901760
    %v637 = vsub.f32 %v353, %v636
    %v638 = vand.u32 %v637, 4294901760
    %639 = vmatpush.msra.mxu0 %v638
    %v640 = vand.u32 %v352, 4294901760
    %v641 = vsub.f32 %v352, %v640
    %v642 = vand.u32 %v641, 4294901760
    %643 = vmatpush.msra.mxu0 %v642
    %v644 = vand.u32 %v351, 4294901760
    %v645 = vsub.f32 %v351, %v644
    %v646 = vand.u32 %v645, 4294901760
    %647 = vmatpush.msra.mxu0 %v646
    %v648 = vand.u32 %v350, 4294901760
    %v649 = vsub.f32 %v350, %v648
    %v650 = vand.u32 %v649, 4294901760
    %651 = vmatpush.msra.mxu0 %v650
    %v652 = vand.u32 %v349, 4294901760
    %v653 = vsub.f32 %v349, %v652
    %v654 = vand.u32 %v653, 4294901760
    %655 = vmatpush.msra.mxu0 %v654
    %v656 = vand.u32 %v348, 4294901760
    %v657 = vsub.f32 %v348, %v656
    %v658 = vand.u32 %v657, 4294901760
    %659 = vmatpush.msra.mxu0 %v658
    %v660 = vand.u32 %v347, 4294901760
    %v661 = vsub.f32 %v347, %v660
    %v662 = vand.u32 %v661, 4294901760
    %663 = vmatpush.msra.mxu0 %v662
    %v664 = vand.u32 %v346, 4294901760
    %v665 = vsub.f32 %v346, %v664
    %v666 = vand.u32 %v665, 4294901760
    %667 = vmatpush.msra.mxu0 %v666
    %v668 = vand.u32 %v345, 4294901760
    %v669 = vsub.f32 %v345, %v668
    %v670 = vand.u32 %v669, 4294901760
    %671 = vmatpush.msra.mxu0 %v670
    %v672 = vand.u32 %v344, 4294901760
    %v673 = vsub.f32 %v344, %v672
    %v674 = vand.u32 %v673, 4294901760
    %675 = vmatpush.msra.mxu0 %v674
    %v676 = vand.u32 %v343, 4294901760
    %v677 = vsub.f32 %v343, %v676
    %v678 = vand.u32 %v677, 4294901760
    %679 = vmatpush.msra.mxu0 %v678
    %v680 = vand.u32 %v342, 4294901760
    %v681 = vsub.f32 %v342, %v680
    %v682 = vand.u32 %v681, 4294901760
    %683 = vmatpush.msra.mxu0 %v682
    %v684 = vand.u32 %v340, 4294901760
    %685 = vmatmul.f32.gmra.mxu0 %v684
    %v686 = vpop.f32.mrf.mxu0
    %v687 = vadd.f32 %v612, %v686
    %v688 = vand.u32 %v341, 4294901760
    %689 = vmatmul.f32.gmra.mxu0 %v688
    %v690 = vpop.f32.mrf.mxu0
    %v691 = vadd.f32 %v618, %v690
    %692 = vdwg.mxu0
    %v693 = vand.u32 %v357, 4294901760
    %694 = vmatpush.msra.mxu0 %v693
    %v695 = vand.u32 %v356, 4294901760
    %696 = vmatpush.msra.mxu0 %v695
    %v697 = vand.u32 %v355, 4294901760
    %698 = vmatpush.msra.mxu0 %v697
    %v699 = vand.u32 %v354, 4294901760
    %700 = vmatpush.msra.mxu0 %v699
    %v701 = vand.u32 %v353, 4294901760
    %702 = vmatpush.msra.mxu0 %v701
    %v703 = vand.u32 %v352, 4294901760
    %704 = vmatpush.msra.mxu0 %v703
    %v705 = vand.u32 %v351, 4294901760
    %706 = vmatpush.msra.mxu0 %v705
    %v707 = vand.u32 %v350, 4294901760
    %708 = vmatpush.msra.mxu0 %v707
    %v709 = vand.u32 %v349, 4294901760
    %710 = vmatpush.msra.mxu0 %v709
    %v711 = vand.u32 %v348, 4294901760
    %712 = vmatpush.msra.mxu0 %v711
    %v713 = vand.u32 %v347, 4294901760
    %714 = vmatpush.msra.mxu0 %v713
    %v715 = vand.u32 %v346, 4294901760
    %716 = vmatpush.msra.mxu0 %v715
    %v717 = vand.u32 %v345, 4294901760
    %718 = vmatpush.msra.mxu0 %v717
    %v719 = vand.u32 %v344, 4294901760
    %720 = vmatpush.msra.mxu0 %v719
    %v721 = vand.u32 %v343, 4294901760
    %722 = vmatpush.msra.mxu0 %v721
    %v723 = vand.u32 %v342, 4294901760
    %724 = vmatpush.msra.mxu0 %v723
    %v725 = vand.u32 %v340, 4294901760
    %726 = vmatmul.f32.gmra.mxu0 %v725
    %v727 = vpop.f32.mrf.mxu0
    %v728 = vadd.f32 %v687, %v727
    %v729 = vand.u32 %v341, 4294901760
    %730 = vmatmul.f32.gmra.mxu0 %v729
    %v731 = vpop.f32.mrf.mxu0
    %v732 = vadd.f32 %v691, %v731
    %733 = vdwg.mxu0
    %vm734 = vcmask 130048
    %735 = vst.msk [vmem:[#allocation2] sm:$0xff] %vm734, %v728
    %736 = vst.msk [vmem:[#allocation2 + $0x8] sm:$0xff] %vm734, %v732
    // Predicated region
    $region22: #{tpu_custom_call.1} parent=1 // pred_check
      _
    $region23: #{tpu_custom_call.1} parent=1 // pred_check_branch
      %738 = sbr.rel (0) target = $region25
    $region24: #{tpu_custom_call.1} parent=1 // pred_region
      %740 = vsyncadd [#allocation3], 0
      %s741 = sshll.u32 [#allocation2], 4
      %s742 = int_to_ptr.vmem [resolvable:$true] %s741
      %s743 = sshll.u32 %s5, 4
      %s744 = int_to_ptr.hbm [resolvable:$true] %s743
      %749 = dma.vmem_to_hbm [thread:$0]  %s742, 256, %s744, [#allocation3], 128, 128, 8
    $region25: #{tpu_custom_call.1} parent=1 // pred_fallthru
      _
    // Predicated region
    $region26: #{tpu_custom_call.1} parent=1 // pred_check
      _
    $region27: #{tpu_custom_call.1} parent=1 // pred_check_branch
      %751 = sbr.rel (0) target = $region29
    $region28: #{tpu_custom_call.1} parent=1 // pred_region
      %753 = dma.done [#allocation3], 256
    $region29: #{tpu_custom_call.1} parent=1 // pred_fallthru
      _
    %754 = vsyncpa [#allocation3], 1

// kernel: tpu_custom_call.1
$region0: #{tpu_custom_call.1}
  #allocation0 [shape = 'u32[]', space=smem, size = 0x4, offset = 0x4, fixed_abs, tag = 'smem constant byte address 0x4 - core index']
  #allocation1 [shape = 'u32[72,128]{1,0:T(1,128)}', space=vmem, size = 0x9000, scoped, tag = 'internal scratch']
  %s0 = inlined_call_operand.vmem [shape: f32[16,32], index: 0, kind: input, shape index: {}]
  %s1 = inlined_call_operand.vmem [shape: f32[32,128], index: 1, kind: input, shape index: {}]
  %s2 = inlined_call_operand.vmem [shape: f32[1,128], index: 2, kind: input, shape index: {}]
  %s3 = inlined_call_operand.vmem [shape: f32[128,16], index: 3, kind: input, shape index: {}]
  %s4 = inlined_call_operand.vmem [shape: f32[1,16], index: 4, kind: input, shape index: {}]
  %s5 = inlined_call_operand.hbm [shape: f32[16,16], index: 5, kind: output, shape index: {}]
  %s6 = sld [smem:[#allocation0]]
  $region30: #{tpu_custom_call.1} parent=0
    _
  %s8 = ssub.s32 1, %s6
  %s9 = scalar_select 0, %s8, %s6
  $region1: #{tpu_custom_call.1} parent=0
    #allocation2 [shape = 'u8[8192]{0}', space=vmem, size = 0x2000, scoped, tag = 'output window, operand 0, single buffered']
    #allocation3 [shape = 's32[1]{0}', space=sflag, size = 0x4, scoped, tag = 'scoped memory for tpu_custom_call.1']
    %10 = vsyncpa [#allocation3], 0
    // Predicated region
    $region2: #{tpu_custom_call.1} parent=1 // pred_check
      _
    $region3: #{tpu_custom_call.1} parent=1 // pred_check_branch
      %12 = sbr.rel (0) target = $region5
    $region4: #{tpu_custom_call.1} parent=1 // pred_region
      _
    $region5: #{tpu_custom_call.1} parent=1 // pred_fallthru
      _
    // Predicated region
    $region6: #{tpu_custom_call.1} parent=1 // pred_check
      _
    $region7: #{tpu_custom_call.1} parent=1 // pred_check_branch
      %14 = sbr.rel (0) target = $region9
    $region8: #{tpu_custom_call.1} parent=1 // pred_region
      _
    $region9: #{tpu_custom_call.1} parent=1 // pred_fallthru
      _
    // Predicated region
    $region10: #{tpu_custom_call.1} parent=1 // pred_check
      _
    $region11: #{tpu_custom_call.1} parent=1 // pred_check_branch
      %16 = sbr.rel (0) target = $region13
    $region12: #{tpu_custom_call.1} parent=1 // pred_region
      _
    $region13: #{tpu_custom_call.1} parent=1 // pred_fallthru
      _
    // Predicated region
    $region14: #{tpu_custom_call.1} parent=1 // pred_check
      _
    $region15: #{tpu_custom_call.1} parent=1 // pred_check_branch
      %18 = sbr.rel (0) target = $region17
    $region16: #{tpu_custom_call.1} parent=1 // pred_region
      _
    $region17: #{tpu_custom_call.1} parent=1 // pred_fallthru
      _
    // Predicated region
    $region18: #{tpu_custom_call.1} parent=1 // pred_check
      _
    $region19: #{tpu_custom_call.1} parent=1 // pred_check_branch
      %20 = sbr.rel (0) target = $region21
    $region20: #{tpu_custom_call.1} parent=1 // pred_region
      _
    $region21: #{tpu_custom_call.1} parent=1 // pred_fallthru
      _
    %v21 = vld [vmem:[%s0] sm:$0xff]
    %v22 = vld [vmem:[%s0 + $0x8] sm:$0xff]
    %v23 = vld [vmem:[%s1] sm:$0xff]
    %v24 = vld [vmem:[%s1 + $0x8] sm:$0xff]
    %v25 = vld [vmem:[%s1 + $0x10] sm:$0xff]
    %v26 = vld [vmem:[%s1 + $0x18] sm:$0xff]
    %v27 = vld [vmem:[%s2] sm:$0x1]
    %v29 = vperm.slane %v27, 0
    %vm31 = vcmask 261120
    %v33 = vsel %vm31, %v21, 0
    %v36 = vsel %vm31, %v22, 0
    %38 = vmatpush.msra.mxu0 0.0
    %39 = vmatpush.msra.mxu0 0.0
    %40 = vmatpush.msra.mxu0 0.0
    %41 = vmatpush.msra.mxu0 0.0
    %42 = vmatpush.msra.mxu0 0.0
    %43 = vmatpush.msra.mxu0 0.0
    %44 = vmatpush.msra.mxu0 0.0
    %45 = vmatpush.msra.mxu0 0.0
    %46 = vmatpush.msra.mxu0 0.0
    %47 = vmatpush.msra.mxu0 0.0
    %48 = vmatpush.msra.mxu0 0.0
    %49 = vmatpush.msra.mxu0 0.0
    %v50 = vand.u32 %v26, 4294901760
    %51 = vmatpush.msra.mxu0 %v50
    %v52 = vand.u32 %v25, 4294901760
    %53 = vmatpush.msra.mxu0 %v52
    %v54 = vand.u32 %v24, 4294901760
    %55 = vmatpush.msra.mxu0 %v54
    %v56 = vand.u32 %v23, 4294901760
    %57 = vmatpush.msra.mxu0 %v56
    %v58 = vand.u32 %v33, 4294901760
    %v59 = vsub.f32 %v33, %v58
    %v60 = vand.u32 %v59, 4294901760
    %v61 = vsub.f32 %v59, %v60
    %v62 = vand.u32 %v61, 4294901760
    %63 = vmatmul.f32.gmra.mxu0 %v62
    %v64 = vpop.f32.mrf.mxu0
    %v65 = vadd.f32 %v29, %v64
    %v66 = vand.u32 %v36, 4294901760
    %v67 = vsub.f32 %v36, %v66
    %v68 = vand.u32 %v67, 4294901760
    %v69 = vsub.f32 %v67, %v68
    %v70 = vand.u32 %v69, 4294901760
    %71 = vmatmul.f32.gmra.mxu0 %v70
    %v72 = vpop.f32.mrf.mxu0
    %v73 = vadd.f32 %v29, %v72
    %74 = vdwg.mxu0
    %75 = vmatpush.msra.mxu0 0.0
    %76 = vmatpush.msra.mxu0 0.0
    %77 = vmatpush.msra.mxu0 0.0
    %78 = vmatpush.msra.mxu0 0.0
    %79 = vmatpush.msra.mxu0 0.0
    %80 = vmatpush.msra.mxu0 0.0
    %81 = vmatpush.msra.mxu0 0.0
    %82 = vmatpush.msra.mxu0 0.0
    %83 = vmatpush.msra.mxu0 0.0
    %84 = vmatpush.msra.mxu0 0.0
    %85 = vmatpush.msra.mxu0 0.0
    %86 = vmatpush.msra.mxu0 0.0
    %v87 = vand.u32 %v26, 4294901760
    %v88 = vsub.f32 %v26, %v87
    %v89 = vand.u32 %v88, 4294901760
    %v90 = vsub.f32 %v88, %v89
    %v91 = vand.u32 %v90, 4294901760
    %92 = vmatpush.msra.mxu0 %v91
    %v93 = vand.u32 %v25, 4294901760
    %v94 = vsub.f32 %v25, %v93
    %v95 = vand.u32 %v94, 4294901760
    %v96 = vsub.f32 %v94, %v95
    %v97 = vand.u32 %v96, 4294901760
    %98 = vmatpush.msra.mxu0 %v97
    %v99 = vand.u32 %v24, 4294901760
    %v100 = vsub.f32 %v24, %v99
    %v101 = vand.u32 %v100, 4294901760
    %v102 = vsub.f32 %v100, %v101
    %v103 = vand.u32 %v102, 4294901760
    %104 = vmatpush.msra.mxu0 %v103
    %v105 = vand.u32 %v23, 4294901760
    %v106 = vsub.f32 %v23, %v105
    %v107 = vand.u32 %v106, 4294901760
    %v108 = vsub.f32 %v106, %v107
    %v109 = vand.u32 %v108, 4294901760
    %110 = vmatpush.msra.mxu0 %v109
    %v111 = vand.u32 %v33, 4294901760
    %112 = vmatmul.f32.gmra.mxu0 %v111
    %v113 = vpop.f32.mrf.mxu0
    %v114 = vadd.f32 %v65, %v113
    %v115 = vand.u32 %v36, 4294901760
    %116 = vmatmul.f32.gmra.mxu0 %v115
    %v117 = vpop.f32.mrf.mxu0
    %v118 = vadd.f32 %v73, %v117
    %119 = vdwg.mxu0
    %120 = vmatpush.msra.mxu0 0.0
    %121 = vmatpush.msra.mxu0 0.0
    %122 = vmatpush.msra.mxu0 0.0
    %123 = vmatpush.msra.mxu0 0.0
    %124 = vmatpush.msra.mxu0 0.0
    %125 = vmatpush.msra.mxu0 0.0
    %126 = vmatpush.msra.mxu0 0.0
    %127 = vmatpush.msra.mxu0 0.0
    %128 = vmatpush.msra.mxu0 0.0
    %129 = vmatpush.msra.mxu0 0.0
    %130 = vmatpush.msra.mxu0 0.0
    %131 = vmatpush.msra.mxu0 0.0
    %v132 = vand.u32 %v26, 4294901760
    %v133 = vsub.f32 %v26, %v132
    %134 = vmatpush.msra.mxu0 %v133
    %v135 = vand.u32 %v25, 4294901760
    %v136 = vsub.f32 %v25, %v135
    %137 = vmatpush.msra.mxu0 %v136
    %v138 = vand.u32 %v24, 4294901760
    %v139 = vsub.f32 %v24, %v138
    %140 = vmatpush.msra.mxu0 %v139
    %v141 = vand.u32 %v23, 4294901760
    %v142 = vsub.f32 %v23, %v141
    %143 = vmatpush.msra.mxu0 %v142
    %v144 = vand.u32 %v33, 4294901760
    %v145 = vsub.f32 %v33, %v144
    %146 = vmatmul.f32.gmra.mxu0 %v145
    %v147 = vpop.f32.mrf.mxu0
    %v148 = vadd.f32 %v114, %v147
    %v149 = vand.u32 %v36, 4294901760
    %v150 = vsub.f32 %v36, %v149
    %151 = vmatmul.f32.gmra.mxu0 %v150
    %v152 = vpop.f32.mrf.mxu0
    %v153 = vadd.f32 %v118, %v152
    %154 = vdwg.mxu0
    %155 = vmatpush.msra.mxu0 0.0
    %156 = vmatpush.msra.mxu0 0.0
    %157 = vmatpush.msra.mxu0 0.0
    %158 = vmatpush.msra.mxu0 0.0
    %159 = vmatpush.msra.mxu0 0.0
    %160 = vmatpush.msra.mxu0 0.0
    %161 = vmatpush.msra.mxu0 0.0
    %162 = vmatpush.msra.mxu0 0.0
    %163 = vmatpush.msra.mxu0 0.0
    %164 = vmatpush.msra.mxu0 0.0
    %165 = vmatpush.msra.mxu0 0.0
    %166 = vmatpush.msra.mxu0 0.0
    %v167 = vand.u32 %v26, 4294901760
    %168 = vmatpush.msra.mxu0 %v167
    %v169 = vand.u32 %v25, 4294901760
    %170 = vmatpush.msra.mxu0 %v169
    %v171 = vand.u32 %v24, 4294901760
    %172 = vmatpush.msra.mxu0 %v171
    %v173 = vand.u32 %v23, 4294901760
    %174 = vmatpush.msra.mxu0 %v173
    %v175 = vand.u32 %v33, 4294901760
    %v176 = vsub.f32 %v33, %v175
    %v177 = vand.u32 %v176, 4294901760
    %178 = vmatmul.f32.gmra.mxu0 %v177
    %v179 = vpop.f32.mrf.mxu0
    %v180 = vadd.f32 %v148, %v179
    %v181 = vand.u32 %v36, 4294901760
    %v182 = vsub.f32 %v36, %v181
    %v183 = vand.u32 %v182, 4294901760
    %184 = vmatmul.f32.gmra.mxu0 %v183
    %v185 = vpop.f32.mrf.mxu0
    %v186 = vadd.f32 %v153, %v185
    %187 = vdwg.mxu0
    %188 = vmatpush.msra.mxu0 0.0
    %189 = vmatpush.msra.mxu0 0.0
    %190 = vmatpush.msra.mxu0 0.0
    %191 = vmatpush.msra.mxu0 0.0
    %192 = vmatpush.msra.mxu0 0.0
    %193 = vmatpush.msra.mxu0 0.0
    %194 = vmatpush.msra.mxu0 0.0
    %195 = vmatpush.msra.mxu0 0.0
    %196 = vmatpush.msra.mxu0 0.0
    %197 = vmatpush.msra.mxu0 0.0
    %198 = vmatpush.msra.mxu0 0.0
    %199 = vmatpush.msra.mxu0 0.0
    %v200 = vand.u32 %v26, 4294901760
    %v201 = vsub.f32 %v26, %v200
    %v202 = vand.u32 %v201, 4294901760
    %203 = vmatpush.msra.mxu0 %v202
    %v204 = vand.u32 %v25, 4294901760
    %v205 = vsub.f32 %v25, %v204
    %v206 = vand.u32 %v205, 4294901760
    %207 = vmatpush.msra.mxu0 %v206
    %v208 = vand.u32 %v24, 4294901760
    %v209 = vsub.f32 %v24, %v208
    %v210 = vand.u32 %v209, 4294901760
    %211 = vmatpush.msra.mxu0 %v210
    %v212 = vand.u32 %v23, 4294901760
    %v213 = vsub.f32 %v23, %v212
    %v214 = vand.u32 %v213, 4294901760
    %215 = vmatpush.msra.mxu0 %v214
    %v216 = vand.u32 %v33, 4294901760
    %217 = vmatmul.f32.gmra.mxu0 %v216
    %v218 = vpop.f32.mrf.mxu0
    %v219 = vadd.f32 %v180, %v218
    %v220 = vand.u32 %v36, 4294901760
    %221 = vmatmul.f32.gmra.mxu0 %v220
    %v222 = vpop.f32.mrf.mxu0
    %v223 = vadd.f32 %v186, %v222
    %224 = vdwg.mxu0
    %225 = vmatpush.msra.mxu0 0.0
    %226 = vmatpush.msra.mxu0 0.0
    %227 = vmatpush.msra.mxu0 0.0
    %228 = vmatpush.msra.mxu0 0.0
    %229 = vmatpush.msra.mxu0 0.0
    %230 = vmatpush.msra.mxu0 0.0
    %231 = vmatpush.msra.mxu0 0.0
    %232 = vmatpush.msra.mxu0 0.0
    %233 = vmatpush.msra.mxu0 0.0
    %234 = vmatpush.msra.mxu0 0.0
    %235 = vmatpush.msra.mxu0 0.0
    %236 = vmatpush.msra.mxu0 0.0
    %v237 = vand.u32 %v26, 4294901760
    %238 = vmatpush.msra.mxu0 %v237
    %v239 = vand.u32 %v25, 4294901760
    %240 = vmatpush.msra.mxu0 %v239
    %v241 = vand.u32 %v24, 4294901760
    %242 = vmatpush.msra.mxu0 %v241
    %v243 = vand.u32 %v23, 4294901760
    %244 = vmatpush.msra.mxu0 %v243
    %v245 = vand.u32 %v33, 4294901760
    %246 = vmatmul.f32.gmra.mxu0 %v245
    %v247 = vpop.f32.mrf.mxu0
    %v248 = vadd.f32 %v219, %v247
    %v249 = vand.u32 %v36, 4294901760
    %250 = vmatmul.f32.gmra.mxu0 %v249
    %v251 = vpop.f32.mrf.mxu0
    %v252 = vadd.f32 %v223, %v251
    %253 = vdwg.mxu0
    %v254 = vmul.f32 %v248, 0.5
    %v255 = vmul.f32 %v252, 0.5
    %v256 = vmul.f32 %v248, 0.70710677
    %v257 = vmul.f32 %v252, 0.70710677
    %v258 = vmul.f32 %v256, %v256
    %v259 = vmin.f32 16.0, %v258
    %v260 = vmul.f32 %v259, 2.1237322e-06
    %v261 = vadd.f32 %v260, 0.00028619796
    %v262 = vmul.f32 %v259, %v261
    %v263 = vadd.f32 %v262, 0.0036580483
    %v264 = vmul.f32 %v259, %v263
    %v265 = vadd.f32 %v264, 0.05243302
    %v266 = vmul.f32 %v259, %v265
    %v267 = vadd.f32 %v266, 0.18741608
    %v268 = vmul.f32 %v259, %v267
    %v269 = vadd.f32 %v268, 1.1283791
    %v270 = vmul.f32 %v256, %v269
    %v271 = vmul.f32 %v259, 3.8918573e-05
    %v272 = vadd.f32 %v271, 0.001143296
    %v273 = vmul.f32 %v259, %v272
    %v274 = vadd.f32 %v273, 0.014752088
    %v275 = vmul.f32 %v259, %v274
    %v276 = vadd.f32 %v275, 0.112945676
    %v277 = vmul.f32 %v259, %v276
    %v278 = vadd.f32 %v277, 0.4994258
    %v279 = vmul.f32 %v259, %v278
    %v280 = vadd.f32 %v279, 1.0
    %v281 = vrcp.pop %v280
    %v282 = vmul.f32 %v280, %v281
    %v283 = vsub.f32 1.0, %v282
    %v284 = vmul.f32 %v281, %v283
    %v285 = vadd.f32 %v281, %v284
    %vm286 = vweird.f32 %v280
    %vm287 = vweird.f32 %v281
    %vm288 = vmor %vm286, %vm287
    %v289 = vsel %vm288, %v281, %v285
    %v290 = vand.u32 2147483647, %v280
    %vm291 = vcmp.eq.f32.partialorder %v290, 8.507059e+37
    %v292 = vand.u32 %v280, 2147483648
    %v293 = vor.u32 1.1754944e-38, %v292
    %v294 = vsel %vm291, %v293, %v289
    %v295 = vmul.f32 %v270, %v294
    %v296 = vmin.f32 %v295, 1.0
    %v297 = vmax.f32 %v296, -1.0
    %v298 = vmul.f32 %v257, %v257
    %v299 = vmin.f32 16.0, %v298
    %v300 = vmul.f32 %v299, 2.1237322e-06
    %v301 = vadd.f32 %v300, 0.00028619796
    %v302 = vmul.f32 %v299, %v301
    %v303 = vadd.f32 %v302, 0.0036580483
    %v304 = vmul.f32 %v299, %v303
    %v305 = vadd.f32 %v304, 0.05243302
    %v306 = vmul.f32 %v299, %v305
    %v307 = vadd.f32 %v306, 0.18741608
    %v308 = vmul.f32 %v299, %v307
    %v309 = vadd.f32 %v308, 1.1283791
    %v310 = vmul.f32 %v257, %v309
    %v311 = vmul.f32 %v299, 3.8918573e-05
    %v312 = vadd.f32 %v311, 0.001143296
    %v313 = vmul.f32 %v299, %v312
    %v314 = vadd.f32 %v313, 0.014752088
    %v315 = vmul.f32 %v299, %v314
    %v316 = vadd.f32 %v315, 0.112945676
    %v317 = vmul.f32 %v299, %v316
    %v318 = vadd.f32 %v317, 0.4994258
    %v319 = vmul.f32 %v299, %v318
    %v320 = vadd.f32 %v319, 1.0
    %v321 = vrcp.pop %v320
    %v322 = vmul.f32 %v320, %v321
    %v323 = vsub.f32 1.0, %v322
    %v324 = vmul.f32 %v321, %v323
    %v325 = vadd.f32 %v321, %v324
    %vm326 = vweird.f32 %v320
    %vm327 = vweird.f32 %v321
    %vm328 = vmor %vm326, %vm327
    %v329 = vsel %vm328, %v321, %v325
    %v330 = vand.u32 2147483647, %v320
    %vm331 = vcmp.eq.f32.partialorder %v330, 8.507059e+37
    %v332 = vand.u32 %v320, 2147483648
    %v333 = vor.u32 1.1754944e-38, %v332
    %v334 = vsel %vm331, %v333, %v329
    %v335 = vmul.f32 %v310, %v334
    %v336 = vmin.f32 %v335, 1.0
    %v337 = vmax.f32 %v336, -1.0
    %v338 = vadd.f32 %v297, 1.0
    %v339 = vadd.f32 %v337, 1.0
    %v340 = vmul.f32 %v254, %v338
    %v341 = vmul.f32 %v255, %v339
    %v342 = vld [vmem:[%s3] sm:$0xff]
    %v343 = vld [vmem:[%s3 + $0x8] sm:$0xff]
    %v344 = vld [vmem:[%s3 + $0x10] sm:$0xff]
    %v345 = vld [vmem:[%s3 + $0x18] sm:$0xff]
    %v346 = vld [vmem:[%s3 + $0x20] sm:$0xff]
    %v347 = vld [vmem:[%s3 + $0x28] sm:$0xff]
    %v348 = vld [vmem:[%s3 + $0x30] sm:$0xff]
    %v349 = vld [vmem:[%s3 + $0x38] sm:$0xff]
    %v350 = vld [vmem:[%s3 + $0x40] sm:$0xff]
    %v351 = vld [vmem:[%s3 + $0x48] sm:$0xff]
    %v352 = vld [vmem:[%s3 + $0x50] sm:$0xff]
    %v353 = vld [vmem:[%s3 + $0x58] sm:$0xff]
    %v354 = vld [vmem:[%s3 + $0x60] sm:$0xff]
    %v355 = vld [vmem:[%s3 + $0x68] sm:$0xff]
    %v356 = vld [vmem:[%s3 + $0x70] sm:$0xff]
    %v357 = vld [vmem:[%s3 + $0x78] sm:$0xff]
    %v358 = vld [vmem:[%s4] sm:$0x1]
    %v360 = vperm.slane %v358, 0
    %v362 = vand.u32 %v357, 4294901760
    %363 = vmatpush.msra.mxu0 %v362
    %v364 = vand.u32 %v356, 4294901760
    %365 = vmatpush.msra.mxu0 %v364
    %v366 = vand.u32 %v355, 4294901760
    %367 = vmatpush.msra.mxu0 %v366
    %v368 = vand.u32 %v354, 4294901760
    %369 = vmatpush.msra.mxu0 %v368
    %v370 = vand.u32 %v353, 4294901760
    %371 = vmatpush.msra.mxu0 %v370
    %v372 = vand.u32 %v352, 4294901760
    %373 = vmatpush.msra.mxu0 %v372
    %v374 = vand.u32 %v351, 4294901760
    %375 = vmatpush.msra.mxu0 %v374
    %v376 = vand.u32 %v350, 4294901760
    %377 = vmatpush.msra.mxu0 %v376
    %v378 = vand.u32 %v349, 4294901760
    %379 = vmatpush.msra.mxu0 %v378
    %v380 = vand.u32 %v348, 4294901760
    %381 = vmatpush.msra.mxu0 %v380
    %v382 = vand.u32 %v347, 4294901760
    %383 = vmatpush.msra.mxu0 %v382
    %v384 = vand.u32 %v346, 4294901760
    %385 = vmatpush.msra.mxu0 %v384
    %v386 = vand.u32 %v345, 4294901760
    %387 = vmatpush.msra.mxu0 %v386
    %v388 = vand.u32 %v344, 4294901760
    %389 = vmatpush.msra.mxu0 %v388
    %v390 = vand.u32 %v343, 4294901760
    %391 = vmatpush.msra.mxu0 %v390
    %v392 = vand.u32 %v342, 4294901760
    %393 = vmatpush.msra.mxu0 %v392
    %v394 = vand.u32 %v340, 4294901760
    %v395 = vsub.f32 %v340, %v394
    %v396 = vand.u32 %v395, 4294901760
    %v397 = vsub.f32 %v395, %v396
    %v398 = vand.u32 %v397, 4294901760
    %399 = vmatmul.f32.gmra.mxu0 %v398
    %v400 = vpop.f32.mrf.mxu0
    %v401 = vadd.f32 %v360, %v400
    %v402 = vand.u32 %v341, 4294901760
    %v403 = vsub.f32 %v341, %v402
    %v404 = vand.u32 %v403, 4294901760
    %v405 = vsub.f32 %v403, %v404
    %v406 = vand.u32 %v405, 4294901760
    %407 = vmatmul.f32.gmra.mxu0 %v406
    %v408 = vpop.f32.mrf.mxu0
    %v409 = vadd.f32 %v360, %v408
    %410 = vdwg.mxu0
    %v411 = vand.u32 %v357, 4294901760
    %v412 = vsub.f32 %v357, %v411
    %v413 = vand.u32 %v412, 4294901760
    %v414 = vsub.f32 %v412, %v413
    %v415 = vand.u32 %v414, 4294901760
    %416 = vmatpush.msra.mxu0 %v415
    %v417 = vand.u32 %v356, 4294901760
    %v418 = vsub.f32 %v356, %v417
    %v419 = vand.u32 %v418, 4294901760
    %v420 = vsub.f32 %v418, %v419
    %v421 = vand.u32 %v420, 4294901760
    %422 = vmatpush.msra.mxu0 %v421
    %v423 = vand.u32 %v355, 4294901760
    %v424 = vsub.f32 %v355, %v423
    %v425 = vand.u32 %v424, 4294901760
    %v426 = vsub.f32 %v424, %v425
    %v427 = vand.u32 %v426, 4294901760
    %428 = vmatpush.msra.mxu0 %v427
    %v429 = vand.u32 %v354, 4294901760
    %v430 = vsub.f32 %v354, %v429
    %v431 = vand.u32 %v430, 4294901760
    %v432 = vsub.f32 %v430, %v431
    %v433 = vand.u32 %v432, 4294901760
    %434 = vmatpush.msra.mxu0 %v433
    %v435 = vand.u32 %v353, 4294901760
    %v436 = vsub.f32 %v353, %v435
    %v437 = vand.u32 %v436, 4294901760
    %v438 = vsub.f32 %v436, %v437
    %v439 = vand.u32 %v438, 4294901760
    %440 = vmatpush.msra.mxu0 %v439
    %v441 = vand.u32 %v352, 4294901760
    %v442 = vsub.f32 %v352, %v441
    %v443 = vand.u32 %v442, 4294901760
    %v444 = vsub.f32 %v442, %v443
    %v445 = vand.u32 %v444, 4294901760
    %446 = vmatpush.msra.mxu0 %v445
    %v447 = vand.u32 %v351, 4294901760
    %v448 = vsub.f32 %v351, %v447
    %v449 = vand.u32 %v448, 4294901760
    %v450 = vsub.f32 %v448, %v449
    %v451 = vand.u32 %v450, 4294901760
    %452 = vmatpush.msra.mxu0 %v451
    %v453 = vand.u32 %v350, 4294901760
    %v454 = vsub.f32 %v350, %v453
    %v455 = vand.u32 %v454, 4294901760
    %v456 = vsub.f32 %v454, %v455
    %v457 = vand.u32 %v456, 4294901760
    %458 = vmatpush.msra.mxu0 %v457
    %v459 = vand.u32 %v349, 4294901760
    %v460 = vsub.f32 %v349, %v459
    %v461 = vand.u32 %v460, 4294901760
    %v462 = vsub.f32 %v460, %v461
    %v463 = vand.u32 %v462, 4294901760
    %464 = vmatpush.msra.mxu0 %v463
    %v465 = vand.u32 %v348, 4294901760
    %v466 = vsub.f32 %v348, %v465
    %v467 = vand.u32 %v466, 4294901760
    %v468 = vsub.f32 %v466, %v467
    %v469 = vand.u32 %v468, 4294901760
    %470 = vmatpush.msra.mxu0 %v469
    %v471 = vand.u32 %v347, 4294901760
    %v472 = vsub.f32 %v347, %v471
    %v473 = vand.u32 %v472, 4294901760
    %v474 = vsub.f32 %v472, %v473
    %v475 = vand.u32 %v474, 4294901760
    %476 = vmatpush.msra.mxu0 %v475
    %v477 = vand.u32 %v346, 4294901760
    %v478 = vsub.f32 %v346, %v477
    %v479 = vand.u32 %v478, 4294901760
    %v480 = vsub.f32 %v478, %v479
    %v481 = vand.u32 %v480, 4294901760
    %482 = vmatpush.msra.mxu0 %v481
    %v483 = vand.u32 %v345, 4294901760
    %v484 = vsub.f32 %v345, %v483
    %v485 = vand.u32 %v484, 4294901760
    %v486 = vsub.f32 %v484, %v485
    %v487 = vand.u32 %v486, 4294901760
    %488 = vmatpush.msra.mxu0 %v487
    %v489 = vand.u32 %v344, 4294901760
    %v490 = vsub.f32 %v344, %v489
    %v491 = vand.u32 %v490, 4294901760
    %v492 = vsub.f32 %v490, %v491
    %v493 = vand.u32 %v492, 4294901760
    %494 = vmatpush.msra.mxu0 %v493
    %v495 = vand.u32 %v343, 4294901760
    %v496 = vsub.f32 %v343, %v495
    %v497 = vand.u32 %v496, 4294901760
    %v498 = vsub.f32 %v496, %v497
    %v499 = vand.u32 %v498, 4294901760
    %500 = vmatpush.msra.mxu0 %v499
    %v501 = vand.u32 %v342, 4294901760
    %v502 = vsub.f32 %v342, %v501
    %v503 = vand.u32 %v502, 4294901760
    %v504 = vsub.f32 %v502, %v503
    %v505 = vand.u32 %v504, 4294901760
    %506 = vmatpush.msra.mxu0 %v505
    %v507 = vand.u32 %v340, 4294901760
    %508 = vmatmul.f32.gmra.mxu0 %v507
    %v509 = vpop.f32.mrf.mxu0
    %v510 = vadd.f32 %v401, %v509
    %v511 = vand.u32 %v341, 4294901760
    %512 = vmatmul.f32.gmra.mxu0 %v511
    %v513 = vpop.f32.mrf.mxu0
    %v514 = vadd.f32 %v409, %v513
    %515 = vdwg.mxu0
    %v516 = vand.u32 %v357, 4294901760
    %v517 = vsub.f32 %v357, %v516
    %518 = vmatpush.msra.mxu0 %v517
    %v519 = vand.u32 %v356, 4294901760
    %v520 = vsub.f32 %v356, %v519
    %521 = vmatpush.msra.mxu0 %v520
    %v522 = vand.u32 %v355, 4294901760
    %v523 = vsub.f32 %v355, %v522
    %524 = vmatpush.msra.mxu0 %v523
    %v525 = vand.u32 %v354, 4294901760
    %v526 = vsub.f32 %v354, %v525
    %527 = vmatpush.msra.mxu0 %v526
    %v528 = vand.u32 %v353, 4294901760
    %v529 = vsub.f32 %v353, %v528
    %530 = vmatpush.msra.mxu0 %v529
    %v531 = vand.u32 %v352, 4294901760
    %v532 = vsub.f32 %v352, %v531
    %533 = vmatpush.msra.mxu0 %v532
    %v534 = vand.u32 %v351, 4294901760
    %v535 = vsub.f32 %v351, %v534
    %536 = vmatpush.msra.mxu0 %v535
    %v537 = vand.u32 %v350, 4294901760
    %v538 = vsub.f32 %v350, %v537
    %539 = vmatpush.msra.mxu0 %v538
    %v540 = vand.u32 %v349, 4294901760
    %v541 = vsub.f32 %v349, %v540
    %542 = vmatpush.msra.mxu0 %v541
    %v543 = vand.u32 %v348, 4294901760
    %v544 = vsub.f32 %v348, %v543
    %545 = vmatpush.msra.mxu0 %v544
    %v546 = vand.u32 %v347, 4294901760
    %v547 = vsub.f32 %v347, %v546
    %548 = vmatpush.msra.mxu0 %v547
    %v549 = vand.u32 %v346, 4294901760
    %v550 = vsub.f32 %v346, %v549
    %551 = vmatpush.msra.mxu0 %v550
    %v552 = vand.u32 %v345, 4294901760
    %v553 = vsub.f32 %v345, %v552
    %554 = vmatpush.msra.mxu0 %v553
    %v555 = vand.u32 %v344, 4294901760
    %v556 = vsub.f32 %v344, %v555
    %557 = vmatpush.msra.mxu0 %v556
    %v558 = vand.u32 %v343, 4294901760
    %v559 = vsub.f32 %v343, %v558
    %560 = vmatpush.msra.mxu0 %v559
    %v561 = vand.u32 %v342, 4294901760
    %v562 = vsub.f32 %v342, %v561
    %563 = vmatpush.msra.mxu0 %v562
    %v564 = vand.u32 %v340, 4294901760
    %v565 = vsub.f32 %v340, %v564
    %566 = vmatmul.f32.gmra.mxu0 %v565
    %v567 = vpop.f32.mrf.mxu0
    %v568 = vadd.f32 %v510, %v567
    %v569 = vand.u32 %v341, 4294901760
    %v570 = vsub.f32 %v341, %v569
    %571 = vmatmul.f32.gmra.mxu0 %v570
    %v572 = vpop.f32.mrf.mxu0
    %v573 = vadd.f32 %v514, %v572
    %574 = vdwg.mxu0
    %v575 = vand.u32 %v357, 4294901760
    %576 = vmatpush.msra.mxu0 %v575
    %v577 = vand.u32 %v356, 4294901760
    %578 = vmatpush.msra.mxu0 %v577
    %v579 = vand.u32 %v355, 4294901760
    %580 = vmatpush.msra.mxu0 %v579
    %v581 = vand.u32 %v354, 4294901760
    %582 = vmatpush.msra.mxu0 %v581
    %v583 = vand.u32 %v353, 4294901760
    %584 = vmatpush.msra.mxu0 %v583
    %v585 = vand.u32 %v352, 4294901760
    %586 = vmatpush.msra.mxu0 %v585
    %v587 = vand.u32 %v351, 4294901760
    %588 = vmatpush.msra.mxu0 %v587
    %v589 = vand.u32 %v350, 4294901760
    %590 = vmatpush.msra.mxu0 %v589
    %v591 = vand.u32 %v349, 4294901760
    %592 = vmatpush.msra.mxu0 %v591
    %v593 = vand.u32 %v348, 4294901760
    %594 = vmatpush.msra.mxu0 %v593
    %v595 = vand.u32 %v347, 4294901760
    %596 = vmatpush.msra.mxu0 %v595
    %v597 = vand.u32 %v346, 4294901760
    %598 = vmatpush.msra.mxu0 %v597
    %v599 = vand.u32 %v345, 4294901760
    %600 = vmatpush.msra.mxu0 %v599
    %v601 = vand.u32 %v344, 4294901760
    %602 = vmatpush.msra.mxu0 %v601
    %v603 = vand.u32 %v343, 4294901760
    %604 = vmatpush.msra.mxu0 %v603
    %v605 = vand.u32 %v342, 4294901760
    %606 = vmatpush.msra.mxu0 %v605
    %v607 = vand.u32 %v340, 4294901760
    %v608 = vsub.f32 %v340, %v607
    %v609 = vand.u32 %v608, 4294901760
    %610 = vmatmul.f32.gmra.mxu0 %v609
    %v611 = vpop.f32.mrf.mxu0
    %v612 = vadd.f32 %v568, %v611
    %v613 = vand.u32 %v341, 4294901760
    %v614 = vsub.f32 %v341, %v613
    %v615 = vand.u32 %v614, 4294901760
    %616 = vmatmul.f32.gmra.mxu0 %v615
    %v617 = vpop.f32.mrf.mxu0
    %v618 = vadd.f32 %v573, %v617
    %619 = vdwg.mxu0
    %v620 = vand.u32 %v357, 4294901760
    %v621 = vsub.f32 %v357, %v620
    %v622 = vand.u32 %v621, 4294901760
    %623 = vmatpush.msra.mxu0 %v622
    %v624 = vand.u32 %v356, 4294901760
    %v625 = vsub.f32 %v356, %v624
    %v626 = vand.u32 %v625, 4294901760
    %627 = vmatpush.msra.mxu0 %v626
    %v628 = vand.u32 %v355, 4294901760
    %v629 = vsub.f32 %v355, %v628
    %v630 = vand.u32 %v629, 4294901760
    %631 = vmatpush.msra.mxu0 %v630
    %v632 = vand.u32 %v354, 4294901760
    %v633 = vsub.f32 %v354, %v632
    %v634 = vand.u32 %v633, 4294901760
    %635 = vmatpush.msra.mxu0 %v634
    %v636 = vand.u32 %v353, 4294901760
    %v637 = vsub.f32 %v353, %v636
    %v638 = vand.u32 %v637, 4294901760
    %639 = vmatpush.msra.mxu0 %v638
    %v640 = vand.u32 %v352, 4294901760
    %v641 = vsub.f32 %v352, %v640
    %v642 = vand.u32 %v641, 4294901760
    %643 = vmatpush.msra.mxu0 %v642
    %v644 = vand.u32 %v351, 4294901760
    %v645 = vsub.f32 %v351, %v644
    %v646 = vand.u32 %v645, 4294901760
    %647 = vmatpush.msra.mxu0 %v646
    %v648 = vand.u32 %v350, 4294901760
    %v649 = vsub.f32 %v350, %v648
    %v650 = vand.u32 %v649, 4294901760
    %651 = vmatpush.msra.mxu0 %v650
    %v652 = vand.u32 %v349, 4294901760
    %v653 = vsub.f32 %v349, %v652
    %v654 = vand.u32 %v653, 4294901760
    %655 = vmatpush.msra.mxu0 %v654
    %v656 = vand.u32 %v348, 4294901760
    %v657 = vsub.f32 %v348, %v656
    %v658 = vand.u32 %v657, 4294901760
    %659 = vmatpush.msra.mxu0 %v658
    %v660 = vand.u32 %v347, 4294901760
    %v661 = vsub.f32 %v347, %v660
    %v662 = vand.u32 %v661, 4294901760
    %663 = vmatpush.msra.mxu0 %v662
    %v664 = vand.u32 %v346, 4294901760
    %v665 = vsub.f32 %v346, %v664
    %v666 = vand.u32 %v665, 4294901760
    %667 = vmatpush.msra.mxu0 %v666
    %v668 = vand.u32 %v345, 4294901760
    %v669 = vsub.f32 %v345, %v668
    %v670 = vand.u32 %v669, 4294901760
    %671 = vmatpush.msra.mxu0 %v670
    %v672 = vand.u32 %v344, 4294901760
    %v673 = vsub.f32 %v344, %v672
    %v674 = vand.u32 %v673, 4294901760
    %675 = vmatpush.msra.mxu0 %v674
    %v676 = vand.u32 %v343, 4294901760
    %v677 = vsub.f32 %v343, %v676
    %v678 = vand.u32 %v677, 4294901760
    %679 = vmatpush.msra.mxu0 %v678
    %v680 = vand.u32 %v342, 4294901760
    %v681 = vsub.f32 %v342, %v680
    %v682 = vand.u32 %v681, 4294901760
    %683 = vmatpush.msra.mxu0 %v682
    %v684 = vand.u32 %v340, 4294901760
    %685 = vmatmul.f32.gmra.mxu0 %v684
    %v686 = vpop.f32.mrf.mxu0
    %v687 = vadd.f32 %v612, %v686
    %v688 = vand.u32 %v341, 4294901760
    %689 = vmatmul.f32.gmra.mxu0 %v688
    %v690 = vpop.f32.mrf.mxu0
    %v691 = vadd.f32 %v618, %v690
    %692 = vdwg.mxu0
    %v693 = vand.u32 %v357, 4294901760
    %694 = vmatpush.msra.mxu0 %v693
    %v695 = vand.u32 %v356, 4294901760
    %696 = vmatpush.msra.mxu0 %v695
    %v697 = vand.u32 %v355, 4294901760
    %698 = vmatpush.msra.mxu0 %v697
    %v699 = vand.u32 %v354, 4294901760
    %700 = vmatpush.msra.mxu0 %v699
    %v701 = vand.u32 %v353, 4294901760
    %702 = vmatpush.msra.mxu0 %v701
    %v703 = vand.u32 %v352, 4294901760
    %704 = vmatpush.msra.mxu0 %v703
    %v705 = vand.u32 %v351, 4294901760
    %706 = vmatpush.msra.mxu0 %v705
    %v707 = vand.u32 %v350, 4294901760
    %708 = vmatpush.msra.mxu0 %v707
    %v709 = vand.u32 %v349, 4294901760
    %710 = vmatpush.msra.mxu0 %v709
    %v711 = vand.u32 %v348, 4294901760
    %712 = vmatpush.msra.mxu0 %v711
    %v713 = vand.u32 %v347, 4294901760
    %714 = vmatpush.msra.mxu0 %v713
    %v715 = vand.u32 %v346, 4294901760
    %716 = vmatpush.msra.mxu0 %v715
    %v717 = vand.u32 %v345, 4294901760
    %718 = vmatpush.msra.mxu0 %v717
    %v719 = vand.u32 %v344, 4294901760
    %720 = vmatpush.msra.mxu0 %v719
    %v721 = vand.u32 %v343, 4294901760
    %722 = vmatpush.msra.mxu0 %v721
    %v723 = vand.u32 %v342, 4294901760
    %724 = vmatpush.msra.mxu0 %v723
    %v725 = vand.u32 %v340, 4294901760
    %726 = vmatmul.f32.gmra.mxu0 %v725
    %v727 = vpop.f32.mrf.mxu0
    %v728 = vadd.f32 %v687, %v727
    %v729 = vand.u32 %v341, 4294901760
    %730 = vmatmul.f32.gmra.mxu0 %v729
    %v731 = vpop.f32.mrf.mxu0
    %v732 = vadd.f32 %v691, %v731
    %733 = vdwg.mxu0
    %vm734 = vcmask 130048
    %735 = vst.msk [vmem:[#allocation2] sm:$0xff] %vm734, %v728
    %736 = vst.msk [vmem:[#allocation2 + $0x8] sm:$0xff] %vm734, %v732
    // Predicated region
    $region22: #{tpu_custom_call.1} parent=1 // pred_check
      _
    $region23: #{tpu_custom_call.1} parent=1 // pred_check_branch
      %738 = sbr.rel (0) target = $region25
    $region24: #{tpu_custom_call.1} parent=1 // pred_region
      %740 = vsyncadd [#allocation3], 0
      %s741 = sshll.u32 [#allocation2], 4
      %s742 = int_to_ptr.vmem [resolvable:$true] %s741
      %s743 = sshll.u32 %s5, 4
      %s744 = int_to_ptr.hbm [resolvable:$true] %s743
      %749 = dma.vmem_to_hbm [thread:$0]  %s742, 256, %s744, [#allocation3], 128, 128, 8
    $region25: #{tpu_custom_call.1} parent=1 // pred_fallthru
      _
    // Predicated region
    $region26: #{tpu_custom_call.1} parent=1 // pred_check
      _
    $region27: #{tpu_custom_call.1} parent=1 // pred_check_branch
      %751 = sbr.rel (0) target = $region29
    $region28: #{tpu_custom_call.1} parent=1 // pred_region
      %753 = dma.done [#allocation3], 256
    $region29: #{tpu_custom_call.1} parent=1 // pred_fallthru
      _
    %754 = vsyncpa [#allocation3], 1

</llo_original>
